<compile_context>
chip_gen: v7x
topology: tpu7x:2x2x1
jax: 0.10.0
libtpu: 0.0.40
codegen_flags: <defaults>
</compile_context>

<pallas_src>
import functools

import jax
import jax.numpy as jnp
from jax.experimental import pallas as pl
from jax.experimental.pallas import tpu as pltpu

_EPS = 1e-5   # nn.InstanceNorm1d default eps
_LANE = 128


def _gelu_exact(x):
    # PyTorch nn.GELU() (exact, erf-based).
    return 0.5 * x * (1.0 + jax.lax.erf(x * 0.7071067811865476))


def _instance_norm(y):
    """y: (Bt, HW, C) f32 -> InstanceNorm1d over HW per (sample, channel).

    Two-pass (centered) biased variance, matching PyTorch and avoiding
    E[x^2]-E[x]^2 cancellation.  Zero-padded channels stay exactly 0.
    """
    mean = jnp.mean(y, axis=1, keepdims=True)
    c = y - mean
    var = jnp.mean(c * c, axis=1, keepdims=True)
    return c * jax.lax.rsqrt(var + _EPS)


def _eiu_kernel(num_heads, key_channels, value_channels, c_pad,
                x_ref, l_ref,
                w_x_ref, b_x_ref,      # fused [w_vis (padded to c_pad) | w_q]
                w_l_ref, b_l_ref,      # fused [w_k * scale | w_v]
                w_W_ref, b_W_ref,      # (Cvv, c_pad) / (1, c_pad)
                w_mm_ref, b_mm_ref,    # (c_pad, c_pad) / (1, c_pad)
                o_ref):
    Bt, HW, Cv = x_ref.shape
    _, Nl, Cl = l_ref.shape
    R = Bt * HW
    Ck = key_channels
    Cvv = value_channels
    dk = Ck // num_heads
    dv = Cvv // num_heads

    # ---- fused x projection: [vis_project conv | f_query conv] -------------
    xz = jnp.dot(x_ref[...].reshape(R, Cv), w_x_ref[...],
                 preferred_element_type=jnp.float32) + b_x_ref[...]  # (R, c_pad+Ck)
    vis = _gelu_exact(xz[:, :c_pad])                         # conv + GELU (+Dropout(0))
    q = _instance_norm(xz[:, c_pad:].reshape(Bt, HW, Ck))    # conv + InstanceNorm1d

    # ---- fused l projection: [f_key conv (pre-scaled) | f_value conv] ------
    lz = jnp.dot(l_ref[...].reshape(Bt * Nl, Cl), w_l_ref[...],
                 preferred_element_type=jnp.float32) + b_l_ref[...]
    lz = lz.reshape(Bt, Nl, Ck + Cvv)

    # bf16 casts hoisted out of the head loop (f32 math stays f32).
    q_bf = q.astype(jnp.bfloat16)
    k_bf = lz[:, :, :Ck].astype(jnp.bfloat16)   # attention scale already folded in
    v_bf = lz[:, :, Ck:].astype(jnp.bfloat16)

    # ---- multi-head attention with w_W fused into the head loop ------------
    acc = jnp.zeros((R, c_pad), jnp.float32)
    for h in range(num_heads):                  # static, unrolled
        q_h = q_bf[:, :, h * dk:(h + 1) * dk]
        k_h = k_bf[:, :, h * dk:(h + 1) * dk]
        v_h = v_bf[:, :, h * dv:(h + 1) * dv]
        sim = jnp.einsum('bqd,bkd->bqk', q_h, k_h,
                         preferred_element_type=jnp.float32)          # (Bt, HW, Nl)
        sim = sim - jnp.max(sim, axis=-1, keepdims=True)
        p = jnp.exp(sim)
        p = p * pl.reciprocal(jnp.sum(p, axis=-1, keepdims=True), approx=True)  # EUP
        att_h = jnp.einsum('bqk,bkd->bqd', p.astype(jnp.bfloat16), v_h,
                           preferred_element_type=jnp.float32)        # (Bt, HW, dv)
        acc = acc + jnp.dot(att_h.reshape(R, dv).astype(jnp.bfloat16),
                            w_W_ref[h * dv:(h + 1) * dv, :],
                            preferred_element_type=jnp.float32)

    # ---- W: (fused conv) + InstanceNorm1d ----------------------------------
    lang = _instance_norm((acc + b_W_ref[...]).reshape(Bt, HW, c_pad)).reshape(R, c_pad)

    # ---- mm = vis * lang ; project_mm: conv + GELU (+Dropout(0)) -----------
    mm = vis * lang
    out = _gelu_exact(jnp.dot(mm.astype(jnp.bfloat16), w_mm_ref[...],
                              preferred_element_type=jnp.float32) + b_mm_ref[...])

    # Lane-dense (c_pad multiple of 128) unmasked store.
    o_ref[...] = out.reshape(Bt, HW, c_pad).astype(o_ref.dtype)


def _round_up(x, m):
    return ((x + m - 1) // m) * m


def eiu_forward(x, l, params, *, num_heads, key_channels):
    """x: (B, HW, dim), l: (B, l_in_channels, Nl) -> (B, HW, value_channels)."""
    B, HW, Cv = x.shape
    _, Cl, Nl = l.shape
    Ck = params["w_q"].shape[1]
    Cvv = params["w_v"].shape[1]
    assert Ck == key_channels
    assert params["w_vis"].shape[1] == Ck
    assert Ck == Cvv, "vis * lang requires key_channels == value_channels"
    assert Ck % num_heads == 0 and Cvv % num_heads == 0, \
        "key/value channels must be divisible by num_heads"

    c_pad = _round_up(Cvv, _LANE)          # lane-dense channel width
    scale = float(key_channels) ** (-0.5)  # folded into k projection

    def pad_cols(w, to):
        return w if w.shape[1] == to else jnp.pad(w, ((0, 0), (0, to - w.shape[1])))

    def pad_rows(w, to):
        return w if w.shape[0] == to else jnp.pad(w, ((0, to - w.shape[0]), (0, 0)))

    # Wrapper-side glue: fused + zero-padded weights, bf16 MXU inputs.
    w_x = jnp.concatenate([pad_cols(params["w_vis"], c_pad), params["w_q"]],
                          axis=1).astype(jnp.bfloat16)                 # (Cv, c_pad+Ck)
    b_x = jnp.concatenate([pad_cols(params["b_vis"], c_pad), params["b_q"]],
                          axis=1).astype(jnp.float32)                  # (1, c_pad+Ck)
    w_l = jnp.concatenate([params["w_k"] * scale, params["w_v"]],
                          axis=1).astype(jnp.bfloat16)                 # (Cl, Ck+Cvv)
    b_l = jnp.concatenate([params["b_k"] * scale, params["b_v"]],
                          axis=1).astype(jnp.float32)                  # (1, Ck+Cvv)
    w_W = pad_cols(params["w_W"], c_pad).astype(jnp.bfloat16)          # (Cvv, c_pad)
    b_W = pad_cols(params["b_W"], c_pad).astype(jnp.float32)
    w_mm = pad_rows(pad_cols(params["w_mm"], c_pad), c_pad).astype(jnp.bfloat16)
    b_mm = pad_cols(params["b_mm"], c_pad).astype(jnp.float32)
    weights = [w_x, b_x, w_l, b_l, w_W, b_W, w_mm, b_mm]
    weight_bytes = sum(int(w.size) * w.dtype.itemsize for w in weights)

    x_bf = x.astype(jnp.bfloat16)                                      # (B, HW, Cv)
    lt_bf = jnp.transpose(l, (0, 2, 1)).astype(jnp.bfloat16)           # (B, Nl, Cl) tiny
    out_itemsize = jnp.dtype(x.dtype).itemsize

    # Device-aware VMEM budget (v7x: 64 MiB / TC; v5e/v6e: 128 MiB).
    try:
        vmem_cap = int(pltpu.get_tpu_info().vmem_capacity_bytes)
    except Exception:
        vmem_cap = 64 << 20  # conservative fallback

    def step_bytes(bt):
        r = bt * HW
        io = 2 * (bt * HW * Cv * 2 + bt * Nl * Cl * 2 + bt * HW * c_pad * out_itemsize)
        inter = 4 * (r * (c_pad + Ck) + 3 * r * c_pad + r * Ck
                     + bt * Nl * (Ck + Cvv) + 2 * bt * HW * Nl)
        return io + 2 * weight_bytes + inter

    # Pick Bt (samples per grid step): smallest divisor of B giving >=256 MXU
    # rows that fits the budget, else the largest divisor that fits.
    budget = vmem_cap // 2
    divisors = [d for d in range(1, B + 1) if B % d == 0]
    Bt = None
    for d in divisors:
        if d * HW >= 256 and step_bytes(d) <= budget:
            Bt = d
            break
    if Bt is None:
        fitting = [d for d in divisors if step_bytes(d) <= budget]
        Bt = fitting[-1] if fitting else 1

    vmem_limit = int(min(max(32 << 20, step_bytes(Bt) + (8 << 20)),
                         (3 * vmem_cap) // 4))

    out_padded = pl.pallas_call(
        functools.partial(_eiu_kernel, num_heads, Ck, Cvv, c_pad),
        out_shape=jax.ShapeDtypeStruct((B, HW, c_pad), x.dtype),
        grid=(B // Bt,),
        in_specs=[pl.BlockSpec((Bt, HW, Cv), lambda b: (b, 0, 0)),     # x block
                  pl.BlockSpec((Bt, Nl, Cl), lambda b: (b, 0, 0))]     # l^T block
                 + [pl.BlockSpec(w.shape, lambda b: (0, 0)) for w in weights],
        out_specs=pl.BlockSpec((Bt, HW, c_pad), lambda b: (b, 0, 0)),
        compiler_params=pltpu.CompilerParams(
            dimension_semantics=("parallel",),
            vmem_limit_bytes=vmem_limit),
    )(x_bf, lt_bf, *weights)

    return out_padded[:, :, :Cvv]


def _eiu_reference(x, l, params, *, num_heads, key_channels):
    # Pure-JAX f32 reference mirroring the PyTorch module exactly.
    def inorm(y):  # (B, T, C): normalize over T per channel, biased variance
        mean = jnp.mean(y, axis=1, keepdims=True)
        var = jnp.mean((y - mean) ** 2, axis=1, keepdims=True)
        return (y - mean) / jnp.sqrt(var + _EPS)

    B, HW, _ = x.shape
    Ck = params["w_q"].shape[1]
    Cvv = params["w_v"].shape[1]
    lt = jnp.transpose(l, (0, 2, 1))                           # (B, Nl, Cl)
    Nl = lt.shape[1]

    vis = _gelu_exact(jnp.einsum("bhc,cd->bhd", x, params["w_vis"]) + params["b_vis"])
    q = inorm(jnp.einsum("bhc,cd->bhd", x, params["w_q"]) + params["b_q"])
    k = jnp.einsum("bnc,cd->bnd", lt, params["w_k"]) + params["b_k"]
    v = jnp.einsum("bnc,cd->bnd", lt, params["w_v"]) + params["b_v"]

    dk = Ck // num_heads
    dv = Cvv // num_heads
    qh = q.reshape(B, HW, num_heads, dk)
    kh = k.reshape(B, Nl, num_heads, dk)
    vh = v.reshape(B, Nl, num_heads, dv)

    sim = jnp.einsum("bqhd,bnhd->bhqn", qh, kh) * (key_channels ** (-0.5))
    p = jax.nn.softmax(sim, axis=-1)
    att = jnp.einsum("bhqn,bnhd->bqhd", p, vh).reshape(B, HW, Cvv)
    lang = inorm(jnp.einsum("bqc,cd->bqd", att, params["w_W"]) + params["b_W"])
    mm = vis * lang
    return _gelu_exact(jnp.einsum("bqc,cd->bqd", mm, params["w_mm"]) + params["b_mm"])


if __name__ == "__main__":
    # Small shapes consistent with the module.
    B, HW, Nl = 2, 64, 8
    dim = v_in_channels = 32       # EIU feeds the same x to vis_project and Attention
    l_in_channels = 16
    key_channels = 32
    value_channels = 32            # must equal key_channels for vis * lang
    num_heads = 2

    key = jax.random.PRNGKey(0)
    ks = jax.random.split(key, 16)

    def init_w(k, cin, cout):
        # Conv1d(cin, cout, 1) weight (cout, cin, 1) stored as (cin, cout) matmul weight.
        return jax.random.normal(k, (cin, cout), jnp.float32) * (cin ** -0.5)

    def init_b(k, c):
        return jax.random.normal(k, (1, c), jnp.float32) * 0.01

    params = {
        "w_vis": init_w(ks[0], dim, key_channels),               "b_vis": init_b(ks[1], key_channels),
        "w_q":   init_w(ks[2], v_in_channels, key_channels),     "b_q":   init_b(ks[3], key_channels),
        "w_k":   init_w(ks[4], l_in_channels, key_channels),     "b_k":   init_b(ks[5], key_channels),
        "w_v":   init_w(ks[6], l_in_channels, value_channels),   "b_v":   init_b(ks[7], value_channels),
        "w_W":   init_w(ks[8], value_channels, value_channels),  "b_W":   init_b(ks[9], value_channels),
        "w_mm":  init_w(ks[10], value_channels, value_channels), "b_mm":  init_b(ks[11], value_channels),
    }

    x = jax.random.normal(ks[12], (B, HW, dim), jnp.float32)            # (B, HW, dim)
    l = jax.random.normal(ks[13], (B, l_in_channels, Nl), jnp.float32)  # (B, Cl, Nl)

    out = eiu_forward(x, l, params, num_heads=num_heads, key_channels=key_channels)
    jax.block_until_ready(out)
    assert out.shape == (B, HW, value_channels)

    # Numerical sanity check against the f32 reference (loose tolerance:
    # bf16 MXU inputs + approx reciprocal introduce small deviations).
    ref = _eiu_reference(x, l, params, num_heads=num_heads, key_channels=key_channels)
    diff = out.astype(jnp.float32) - ref
    rel = float(jnp.sqrt(jnp.sum(diff * diff)) /
                (jnp.sqrt(jnp.sum(ref * ref)) + 1e-8))
    assert rel < 8e-2, f"relative L2 error too large: {rel}"
    print("KERNEL_OK")
</pallas_src>

<mosaic_0001>
module attributes {stable_mosaic.version = 11 : i64} {
  func.func @_eiu_kernel(%arg0: i32, %arg1: memref<2x64x32xbf16, #tpu.memory_space<vmem>>, %arg2: memref<2x8x16xbf16, #tpu.memory_space<vmem>>, %arg3: memref<32x160xbf16, #tpu.memory_space<vmem>>, %arg4: memref<1x160xf32, #tpu.memory_space<vmem>>, %arg5: memref<16x64xbf16, #tpu.memory_space<vmem>>, %arg6: memref<1x64xf32, #tpu.memory_space<vmem>>, %arg7: memref<32x128xbf16, #tpu.memory_space<vmem>>, %arg8: memref<1x128xf32, #tpu.memory_space<vmem>>, %arg9: memref<128x128xbf16, #tpu.memory_space<vmem>>, %arg10: memref<1x128xf32, #tpu.memory_space<vmem>>, %arg11: memref<2x64x128xf32, #tpu.memory_space<vmem>>) attributes {dimension_semantics = [#tpu.dimension_semantics<parallel>], iteration_bounds = array<i64: 1>, scalar_prefetch = 0 : i64, scratch_operands = 0 : i64, tpu.core_type = #tpu.core_type<tc>, window_params = [{transform_indices = @transform_0, window_bounds = array<i64: 2, 64, 32>}, {transform_indices = @transform_1, window_bounds = array<i64: 2, 8, 16>}, {pipeline_mode = #tpu.pipeline_mode<synchronous>, transform_indices = @transform_2, window_bounds = array<i64: 32, 160>}, {pipeline_mode = #tpu.pipeline_mode<synchronous>, transform_indices = @transform_3, window_bounds = array<i64: 1, 160>}, {pipeline_mode = #tpu.pipeline_mode<synchronous>, transform_indices = @transform_4, window_bounds = array<i64: 16, 64>}, {pipeline_mode = #tpu.pipeline_mode<synchronous>, transform_indices = @transform_5, window_bounds = array<i64: 1, 64>}, {pipeline_mode = #tpu.pipeline_mode<synchronous>, transform_indices = @transform_6, window_bounds = array<i64: 32, 128>}, {pipeline_mode = #tpu.pipeline_mode<synchronous>, transform_indices = @transform_7, window_bounds = array<i64: 1, 128>}, {pipeline_mode = #tpu.pipeline_mode<synchronous>, transform_indices = @transform_8, window_bounds = array<i64: 128, 128>}, {pipeline_mode = #tpu.pipeline_mode<synchronous>, transform_indices = @transform_9, window_bounds = array<i64: 1, 128>}, {transform_indices = @transform_10, window_bounds = array<i64: 2, 64, 128>}]} {
    %c0 = arith.constant 0 : index
    %c0_0 = arith.constant 0 : index
    %c0_1 = arith.constant 0 : index
    %0 = vector.load %arg1[%c0, %c0_0, %c0_1] : memref<2x64x32xbf16, #tpu.memory_space<vmem>>, vector<2x64x32xbf16>
    %1 = vector.shape_cast %0 : vector<2x64x32xbf16> to vector<128x32xbf16>
    %c0_2 = arith.constant 0 : index
    %c0_3 = arith.constant 0 : index
    %2 = vector.load %arg3[%c0_2, %c0_3] : memref<32x160xbf16, #tpu.memory_space<vmem>>, vector<32x160xbf16>
    %cst = arith.constant dense<0.000000e+00> : vector<128x160xf32>
    %3 = tpu.matmul %1, %2, %cst {dimension_numbers = #tpu.dot_dimension_numbers<[1], [0], [0], [1], [0, 0, 1, 1], [], []>} : vector<128x32xbf16>, vector<32x160xbf16>, vector<128x160xf32> -> vector<128x160xf32>
    %c0_4 = arith.constant 0 : index
    %c0_5 = arith.constant 0 : index
    %4 = vector.load %arg4[%c0_4, %c0_5] : memref<1x160xf32, #tpu.memory_space<vmem>>, vector<1x160xf32>
    %5 = vector.broadcast %4 : vector<1x160xf32> to vector<128x160xf32>
    %6 = arith.addf %3, %5 : vector<128x160xf32>
    %7 = vector.extract_strided_slice %6 {offsets = [0, 0], sizes = [128, 128], strides = [1, 1]} : vector<128x160xf32> to vector<128x128xf32>
    %cst_6 = arith.constant 5.000000e-01 : f32
    %8 = vector.broadcast %cst_6 : f32 to vector<128x128xf32>
    %9 = arith.mulf %8, %7 : vector<128x128xf32>
    %cst_7 = arith.constant 0.707106769 : f32
    %10 = vector.broadcast %cst_7 : f32 to vector<128x128xf32>
    %11 = arith.mulf %7, %10 : vector<128x128xf32>
    %12 = math.erf %11 : vector<128x128xf32>
    %cst_8 = arith.constant 1.000000e+00 : f32
    %13 = vector.broadcast %cst_8 : f32 to vector<128x128xf32>
    %14 = arith.addf %13, %12 : vector<128x128xf32>
    %15 = arith.mulf %9, %14 : vector<128x128xf32>
    %16 = vector.extract_strided_slice %6 {offsets = [0, 128], sizes = [128, 32], strides = [1, 1]} : vector<128x160xf32> to vector<128x32xf32>
    %17 = vector.shape_cast %16 : vector<128x32xf32> to vector<2x64x32xf32>
    %cst_9 = arith.constant dense<0.000000e+00> : vector<2x32xf32>
    %18 = vector.multi_reduction <add>, %17, %cst_9 [1] : vector<2x64x32xf32> to vector<2x32xf32>
    %19 = vector.shape_cast %18 : vector<2x32xf32> to vector<2x1x32xf32>
    %cst_10 = arith.constant 6.400000e+01 : f32
    %20 = vector.broadcast %cst_10 : f32 to vector<2x1x32xf32>
    %21 = arith.divf %19, %20 : vector<2x1x32xf32>
    %22 = vector.broadcast %21 : vector<2x1x32xf32> to vector<2x64x32xf32>
    %23 = arith.subf %17, %22 : vector<2x64x32xf32>
    %24 = arith.mulf %23, %23 : vector<2x64x32xf32>
    %cst_11 = arith.constant dense<0.000000e+00> : vector<2x32xf32>
    %25 = vector.multi_reduction <add>, %24, %cst_11 [1] : vector<2x64x32xf32> to vector<2x32xf32>
    %26 = vector.shape_cast %25 : vector<2x32xf32> to vector<2x1x32xf32>
    %cst_12 = arith.constant 6.400000e+01 : f32
    %27 = vector.broadcast %cst_12 : f32 to vector<2x1x32xf32>
    %28 = arith.divf %26, %27 : vector<2x1x32xf32>
    %cst_13 = arith.constant 9.99999974E-6 : f32
    %29 = vector.broadcast %cst_13 : f32 to vector<2x1x32xf32>
    %30 = arith.addf %28, %29 : vector<2x1x32xf32>
    %31 = math.rsqrt %30 : vector<2x1x32xf32>
    %32 = vector.broadcast %31 : vector<2x1x32xf32> to vector<2x64x32xf32>
    %33 = arith.mulf %23, %32 : vector<2x64x32xf32>
    %c0_14 = arith.constant 0 : index
    %c0_15 = arith.constant 0 : index
    %c0_16 = arith.constant 0 : index
    %34 = vector.load %arg2[%c0_14, %c0_15, %c0_16] : memref<2x8x16xbf16, #tpu.memory_space<vmem>>, vector<2x8x16xbf16>
    %35 = vector.shape_cast %34 : vector<2x8x16xbf16> to vector<16x16xbf16>
    %c0_17 = arith.constant 0 : index
    %c0_18 = arith.constant 0 : index
    %36 = vector.load %arg5[%c0_17, %c0_18] : memref<16x64xbf16, #tpu.memory_space<vmem>>, vector<16x64xbf16>
    %cst_19 = arith.constant dense<0.000000e+00> : vector<16x64xf32>
    %37 = tpu.matmul %35, %36, %cst_19 {dimension_numbers = #tpu.dot_dimension_numbers<[1], [0], [0], [1], [0, 0, 1, 1], [], []>} : vector<16x16xbf16>, vector<16x64xbf16>, vector<16x64xf32> -> vector<16x64xf32>
    %c0_20 = arith.constant 0 : index
    %c0_21 = arith.constant 0 : index
    %38 = vector.load %arg6[%c0_20, %c0_21] : memref<1x64xf32, #tpu.memory_space<vmem>>, vector<1x64xf32>
    %39 = vector.broadcast %38 : vector<1x64xf32> to vector<16x64xf32>
    %40 = arith.addf %37, %39 : vector<16x64xf32>
    %41 = vector.shape_cast %40 : vector<16x64xf32> to vector<2x8x64xf32>
    %42 = arith.truncf %33 : vector<2x64x32xf32> to vector<2x64x32xbf16>
    %43 = vector.extract_strided_slice %41 {offsets = [0, 0, 0], sizes = [2, 8, 32], strides = [1, 1, 1]} : vector<2x8x64xf32> to vector<2x8x32xf32>
    %44 = arith.truncf %43 : vector<2x8x32xf32> to vector<2x8x32xbf16>
    %45 = vector.extract_strided_slice %41 {offsets = [0, 0, 32], sizes = [2, 8, 32], strides = [1, 1, 1]} : vector<2x8x64xf32> to vector<2x8x32xf32>
    %46 = arith.truncf %45 : vector<2x8x32xf32> to vector<2x8x32xbf16>
    %cst_22 = arith.constant 0.000000e+00 : f32
    %47 = vector.broadcast %cst_22 : f32 to vector<128x128xf32>
    %48 = vector.extract_strided_slice %42 {offsets = [0, 0, 0], sizes = [2, 64, 16], strides = [1, 1, 1]} : vector<2x64x32xbf16> to vector<2x64x16xbf16>
    %49 = vector.extract_strided_slice %44 {offsets = [0, 0, 0], sizes = [2, 8, 16], strides = [1, 1, 1]} : vector<2x8x32xbf16> to vector<2x8x16xbf16>
    %50 = vector.extract_strided_slice %46 {offsets = [0, 0, 0], sizes = [2, 8, 16], strides = [1, 1, 1]} : vector<2x8x32xbf16> to vector<2x8x16xbf16>
    "tpu.trace_start"() <{level = 10 : i32, message = "bqd,bkd->bqk"}> : () -> ()
    %cst_23 = arith.constant dense<0.000000e+00> : vector<2x64x8xf32>
    %51 = tpu.matmul %48, %49, %cst_23 {dimension_numbers = #tpu.dot_dimension_numbers<[2], [2], [1], [1], [0, 0, 0, 1, 1, 1], [0], [0]>} : vector<2x64x16xbf16>, vector<2x8x16xbf16>, vector<2x64x8xf32> -> vector<2x64x8xf32>
    "tpu.trace_stop"() : () -> ()
    %cst_24 = arith.constant dense<0xFF800000> : vector<2x64xf32>
    %52 = vector.multi_reduction <maximumf>, %51, %cst_24 [2] : vector<2x64x8xf32> to vector<2x64xf32>
    %53 = vector.shape_cast %52 : vector<2x64xf32> to vector<2x64x1xf32>
    %54 = vector.broadcast %53 : vector<2x64x1xf32> to vector<2x64x8xf32>
    %55 = arith.subf %51, %54 : vector<2x64x8xf32>
    %56 = math.exp %55 : vector<2x64x8xf32>
    %cst_25 = arith.constant dense<0.000000e+00> : vector<2x64xf32>
    %57 = vector.multi_reduction <add>, %56, %cst_25 [2] : vector<2x64x8xf32> to vector<2x64xf32>
    %58 = vector.shape_cast %57 : vector<2x64xf32> to vector<2x64x1xf32>
    %59 = tpu.reciprocal %58 {approx = true} : vector<2x64x1xf32> -> vector<2x64x1xf32>
    %60 = vector.broadcast %59 : vector<2x64x1xf32> to vector<2x64x8xf32>
    %61 = arith.mulf %56, %60 : vector<2x64x8xf32>
    %62 = arith.truncf %61 : vector<2x64x8xf32> to vector<2x64x8xbf16>
    "tpu.trace_start"() <{level = 10 : i32, message = "bqk,bkd->bqd"}> : () -> ()
    %cst_26 = arith.constant dense<0.000000e+00> : vector<2x64x16xf32>
    %63 = tpu.matmul %62, %50, %cst_26 {dimension_numbers = #tpu.dot_dimension_numbers<[2], [1], [1], [2], [0, 0, 0, 1, 1, 2], [0], [0]>} : vector<2x64x8xbf16>, vector<2x8x16xbf16>, vector<2x64x16xf32> -> vector<2x64x16xf32>
    "tpu.trace_stop"() : () -> ()
    %64 = vector.shape_cast %63 : vector<2x64x16xf32> to vector<128x16xf32>
    %65 = arith.truncf %64 : vector<128x16xf32> to vector<128x16xbf16>
    %c0_27 = arith.constant 0 : index
    %c0_28 = arith.constant 0 : index
    %66 = vector.load %arg7[%c0_27, %c0_28] : memref<32x128xbf16, #tpu.memory_space<vmem>>, vector<16x128xbf16>
    %cst_29 = arith.constant dense<0.000000e+00> : vector<128x128xf32>
    %67 = tpu.matmul %65, %66, %cst_29 {dimension_numbers = #tpu.dot_dimension_numbers<[1], [0], [0], [1], [0, 0, 1, 1], [], []>} : vector<128x16xbf16>, vector<16x128xbf16>, vector<128x128xf32> -> vector<128x128xf32>
    %68 = arith.addf %47, %67 : vector<128x128xf32>
    %69 = vector.extract_strided_slice %42 {offsets = [0, 0, 16], sizes = [2, 64, 16], strides = [1, 1, 1]} : vector<2x64x32xbf16> to vector<2x64x16xbf16>
    %70 = vector.extract_strided_slice %44 {offsets = [0, 0, 16], sizes = [2, 8, 16], strides = [1, 1, 1]} : vector<2x8x32xbf16> to vector<2x8x16xbf16>
    %71 = vector.extract_strided_slice %46 {offsets = [0, 0, 16], sizes = [2, 8, 16], strides = [1, 1, 1]} : vector<2x8x32xbf16> to vector<2x8x16xbf16>
    "tpu.trace_start"() <{level = 10 : i32, message = "bqd,bkd->bqk"}> : () -> ()
    %cst_30 = arith.constant dense<0.000000e+00> : vector<2x64x8xf32>
    %72 = tpu.matmul %69, %70, %cst_30 {dimension_numbers = #tpu.dot_dimension_numbers<[2], [2], [1], [1], [0, 0, 0, 1, 1, 1], [0], [0]>} : vector<2x64x16xbf16>, vector<2x8x16xbf16>, vector<2x64x8xf32> -> vector<2x64x8xf32>
    "tpu.trace_stop"() : () -> ()
    %cst_31 = arith.constant dense<0xFF800000> : vector<2x64xf32>
    %73 = vector.multi_reduction <maximumf>, %72, %cst_31 [2] : vector<2x64x8xf32> to vector<2x64xf32>
    %74 = vector.shape_cast %73 : vector<2x64xf32> to vector<2x64x1xf32>
    %75 = vector.broadcast %74 : vector<2x64x1xf32> to vector<2x64x8xf32>
    %76 = arith.subf %72, %75 : vector<2x64x8xf32>
    %77 = math.exp %76 : vector<2x64x8xf32>
    %cst_32 = arith.constant dense<0.000000e+00> : vector<2x64xf32>
    %78 = vector.multi_reduction <add>, %77, %cst_32 [2] : vector<2x64x8xf32> to vector<2x64xf32>
    %79 = vector.shape_cast %78 : vector<2x64xf32> to vector<2x64x1xf32>
    %80 = tpu.reciprocal %79 {approx = true} : vector<2x64x1xf32> -> vector<2x64x1xf32>
    %81 = vector.broadcast %80 : vector<2x64x1xf32> to vector<2x64x8xf32>
    %82 = arith.mulf %77, %81 : vector<2x64x8xf32>
    %83 = arith.truncf %82 : vector<2x64x8xf32> to vector<2x64x8xbf16>
    "tpu.trace_start"() <{level = 10 : i32, message = "bqk,bkd->bqd"}> : () -> ()
    %cst_33 = arith.constant dense<0.000000e+00> : vector<2x64x16xf32>
    %84 = tpu.matmul %83, %71, %cst_33 {dimension_numbers = #tpu.dot_dimension_numbers<[2], [1], [1], [2], [0, 0, 0, 1, 1, 2], [0], [0]>} : vector<2x64x8xbf16>, vector<2x8x16xbf16>, vector<2x64x16xf32> -> vector<2x64x16xf32>
    "tpu.trace_stop"() : () -> ()
    %85 = vector.shape_cast %84 : vector<2x64x16xf32> to vector<128x16xf32>
    %86 = arith.truncf %85 : vector<128x16xf32> to vector<128x16xbf16>
    %c16 = arith.constant 16 : index
    %c0_34 = arith.constant 0 : index
    %87 = vector.load %arg7[%c16, %c0_34] : memref<32x128xbf16, #tpu.memory_space<vmem>>, vector<16x128xbf16>
    %cst_35 = arith.constant dense<0.000000e+00> : vector<128x128xf32>
    %88 = tpu.matmul %86, %87, %cst_35 {dimension_numbers = #tpu.dot_dimension_numbers<[1], [0], [0], [1], [0, 0, 1, 1], [], []>} : vector<128x16xbf16>, vector<16x128xbf16>, vector<128x128xf32> -> vector<128x128xf32>
    %89 = arith.addf %68, %88 : vector<128x128xf32>
    %c0_36 = arith.constant 0 : index
    %c0_37 = arith.constant 0 : index
    %90 = vector.load %arg8[%c0_36, %c0_37] : memref<1x128xf32, #tpu.memory_space<vmem>>, vector<1x128xf32>
    %91 = vector.broadcast %90 : vector<1x128xf32> to vector<128x128xf32>
    %92 = arith.addf %89, %91 : vector<128x128xf32>
    %93 = vector.shape_cast %92 : vector<128x128xf32> to vector<2x64x128xf32>
    %cst_38 = arith.constant dense<0.000000e+00> : vector<2x128xf32>
    %94 = vector.multi_reduction <add>, %93, %cst_38 [1] : vector<2x64x128xf32> to vector<2x128xf32>
    %95 = vector.shape_cast %94 : vector<2x128xf32> to vector<2x1x128xf32>
    %cst_39 = arith.constant 6.400000e+01 : f32
    %96 = vector.broadcast %cst_39 : f32 to vector<2x1x128xf32>
    %97 = arith.divf %95, %96 : vector<2x1x128xf32>
    %98 = vector.broadcast %97 : vector<2x1x128xf32> to vector<2x64x128xf32>
    %99 = arith.subf %93, %98 : vector<2x64x128xf32>
    %100 = arith.mulf %99, %99 : vector<2x64x128xf32>
    %cst_40 = arith.constant dense<0.000000e+00> : vector<2x128xf32>
    %101 = vector.multi_reduction <add>, %100, %cst_40 [1] : vector<2x64x128xf32> to vector<2x128xf32>
    %102 = vector.shape_cast %101 : vector<2x128xf32> to vector<2x1x128xf32>
    %cst_41 = arith.constant 6.400000e+01 : f32
    %103 = vector.broadcast %cst_41 : f32 to vector<2x1x128xf32>
    %104 = arith.divf %102, %103 : vector<2x1x128xf32>
    %cst_42 = arith.constant 9.99999974E-6 : f32
    %105 = vector.broadcast %cst_42 : f32 to vector<2x1x128xf32>
    %106 = arith.addf %104, %105 : vector<2x1x128xf32>
    %107 = math.rsqrt %106 : vector<2x1x128xf32>
    %108 = vector.broadcast %107 : vector<2x1x128xf32> to vector<2x64x128xf32>
    %109 = arith.mulf %99, %108 : vector<2x64x128xf32>
    %110 = vector.shape_cast %109 : vector<2x64x128xf32> to vector<128x128xf32>
    %111 = arith.mulf %15, %110 : vector<128x128xf32>
    %112 = arith.truncf %111 : vector<128x128xf32> to vector<128x128xbf16>
    %c0_43 = arith.constant 0 : index
    %c0_44 = arith.constant 0 : index
    %113 = vector.load %arg9[%c0_43, %c0_44] : memref<128x128xbf16, #tpu.memory_space<vmem>>, vector<128x128xbf16>
    %cst_45 = arith.constant dense<0.000000e+00> : vector<128x128xf32>
    %114 = tpu.matmul %112, %113, %cst_45 {dimension_numbers = #tpu.dot_dimension_numbers<[1], [0], [0], [1], [0, 0, 1, 1], [], []>} : vector<128x128xbf16>, vector<128x128xbf16>, vector<128x128xf32> -> vector<128x128xf32>
    %c0_46 = arith.constant 0 : index
    %c0_47 = arith.constant 0 : index
    %115 = vector.load %arg10[%c0_46, %c0_47] : memref<1x128xf32, #tpu.memory_space<vmem>>, vector<1x128xf32>
    %116 = vector.broadcast %115 : vector<1x128xf32> to vector<128x128xf32>
    %117 = arith.addf %114, %116 : vector<128x128xf32>
    %cst_48 = arith.constant 5.000000e-01 : f32
    %118 = vector.broadcast %cst_48 : f32 to vector<128x128xf32>
    %119 = arith.mulf %118, %117 : vector<128x128xf32>
    %cst_49 = arith.constant 0.707106769 : f32
    %120 = vector.broadcast %cst_49 : f32 to vector<128x128xf32>
    %121 = arith.mulf %117, %120 : vector<128x128xf32>
    %122 = math.erf %121 : vector<128x128xf32>
    %cst_50 = arith.constant 1.000000e+00 : f32
    %123 = vector.broadcast %cst_50 : f32 to vector<128x128xf32>
    %124 = arith.addf %123, %122 : vector<128x128xf32>
    %125 = arith.mulf %119, %124 : vector<128x128xf32>
    %126 = vector.shape_cast %125 : vector<128x128xf32> to vector<2x64x128xf32>
    %c0_51 = arith.constant 0 : index
    %c0_52 = arith.constant 0 : index
    %c0_53 = arith.constant 0 : index
    %127 = vector.load %arg11[%c0_51, %c0_52, %c0_53] : memref<2x64x128xf32, #tpu.memory_space<vmem>>, vector<2x64x128xf32>
    tpu.vector_store %arg11[%c0_51, %c0_52, %c0_53], %126 {strides = array<i32>} : memref<2x64x128xf32, #tpu.memory_space<vmem>>, vector<2x64x128xf32>,
    return
  }
  func.func @transform_0(%arg0: i32) -> (i32, i32, i32) {
    %c0_i32 = arith.constant 0 : i32
    %c0_i32_0 = arith.constant 0 : i32
    %c0_i32_1 = arith.constant 0 : i32
    return %arg0, %c0_i32, %c0_i32_0 : i32, i32, i32
  }
  func.func @transform_1(%arg0: i32) -> (i32, i32, i32) {
    %c0_i32 = arith.constant 0 : i32
    %c0_i32_0 = arith.constant 0 : i32
    %c0_i32_1 = arith.constant 0 : i32
    return %arg0, %c0_i32, %c0_i32_0 : i32, i32, i32
  }
  func.func @transform_2(%arg0: i32) -> (i32, i32) {
    %c0_i32 = arith.constant 0 : i32
    %c0_i32_0 = arith.constant 0 : i32
    %c0_i32_1 = arith.constant 0 : i32
    return %c0_i32, %c0_i32_0 : i32, i32
  }
  func.func @transform_3(%arg0: i32) -> (i32, i32) {
    %c0_i32 = arith.constant 0 : i32
    %c0_i32_0 = arith.constant 0 : i32
    %c0_i32_1 = arith.constant 0 : i32
    return %c0_i32, %c0_i32_0 : i32, i32
  }
  func.func @transform_4(%arg0: i32) -> (i32, i32) {
    %c0_i32 = arith.constant 0 : i32
    %c0_i32_0 = arith.constant 0 : i32
    %c0_i32_1 = arith.constant 0 : i32
    return %c0_i32, %c0_i32_0 : i32, i32
  }
  func.func @transform_5(%arg0: i32) -> (i32, i32) {
    %c0_i32 = arith.constant 0 : i32
    %c0_i32_0 = arith.constant 0 : i32
    %c0_i32_1 = arith.constant 0 : i32
    return %c0_i32, %c0_i32_0 : i32, i32
  }
  func.func @transform_6(%arg0: i32) -> (i32, i32) {
    %c0_i32 = arith.constant 0 : i32
    %c0_i32_0 = arith.constant 0 : i32
    %c0_i32_1 = arith.constant 0 : i32
    return %c0_i32, %c0_i32_0 : i32, i32
  }
  func.func @transform_7(%arg0: i32) -> (i32, i32) {
    %c0_i32 = arith.constant 0 : i32
    %c0_i32_0 = arith.constant 0 : i32
    %c0_i32_1 = arith.constant 0 : i32
    return %c0_i32, %c0_i32_0 : i32, i32
  }
  func.func @transform_8(%arg0: i32) -> (i32, i32) {
    %c0_i32 = arith.constant 0 : i32
    %c0_i32_0 = arith.constant 0 : i32
    %c0_i32_1 = arith.constant 0 : i32
    return %c0_i32, %c0_i32_0 : i32, i32
  }
  func.func @transform_9(%arg0: i32) -> (i32, i32) {
    %c0_i32 = arith.constant 0 : i32
    %c0_i32_0 = arith.constant 0 : i32
    %c0_i32_1 = arith.constant 0 : i32
    return %c0_i32, %c0_i32_0 : i32, i32
  }
  func.func @transform_10(%arg0: i32) -> (i32, i32, i32) {
    %c0_i32 = arith.constant 0 : i32
    %c0_i32_0 = arith.constant 0 : i32
    %c0_i32_1 = arith.constant 0 : i32
    return %arg0, %c0_i32, %c0_i32_0 : i32, i32, i32
  }
}

</mosaic_0001>

<llo_original>
// kernel: tpu_custom_call.1
$region0: #{tpu_custom_call.1}
  #allocation0 [shape = 'u32[]', space=smem, size = 0x4, offset = 0x4, fixed_abs, tag = 'smem constant byte address 0x4 - core index']
  #allocation1 [shape = 'u32[144,128]{1,0:T(1,128)}', space=vmem, size = 0x12000, scoped, tag = 'internal scratch']
  %s0 = inlined_call_operand.vmem [shape: bf16[2,64,32], index: 0, kind: input, shape index: {}]
  %s1 = inlined_call_operand.vmem [shape: bf16[2,8,16], index: 1, kind: input, shape index: {}]
  %s2 = inlined_call_operand.vmem [shape: bf16[32,160], index: 2, kind: input, shape index: {}]
  %s3 = inlined_call_operand.vmem [shape: f32[1,160], index: 3, kind: input, shape index: {}]
  %s4 = inlined_call_operand.hbm [shape: bf16[16,64], index: 4, kind: input, shape index: {}]
  %s5 = inlined_call_operand.vmem [shape: f32[1,64], index: 5, kind: input, shape index: {}]
  %s6 = inlined_call_operand.vmem [shape: bf16[32,128], index: 6, kind: input, shape index: {}]
  %s7 = inlined_call_operand.vmem [shape: f32[1,128], index: 7, kind: input, shape index: {}]
  %s8 = inlined_call_operand.vmem [shape: bf16[128,128], index: 8, kind: input, shape index: {}]
  %s9 = inlined_call_operand.vmem [shape: f32[1,128], index: 9, kind: input, shape index: {}]
  %s10 = inlined_call_operand.hbm [shape: f32[2,64,128], index: 10, kind: output, shape index: {}]
  %s11 = sld [smem:[#allocation0]]
  $region54: #{tpu_custom_call.1} parent=0
    _
  %s13 = ssub.s32 1, %s11
  %s14 = scalar_select 0, %s13, %s11
  $region1: #{tpu_custom_call.1} parent=0
    #allocation2 [shape = 'u8[4096]{0}', space=vmem, size = 0x1000, scoped, tag = 'input window, operand 4, single buffered']
    #allocation3 [shape = 's32[1]{0}', space=sflag, size = 0x4, scoped, tag = 'scoped memory for tpu_custom_call.1']
    #allocation4 [shape = 's32[1]{0}', space=sflag, size = 0x4, scoped, tag = 'scoped memory for tpu_custom_call.1']
    #allocation5 [shape = 'u8[65536]{0}', space=vmem, size = 0x10000, scoped, tag = 'output window, operand 0, single buffered']
    %15 = vsyncpa [#allocation3], 0
    %16 = vsyncpa [#allocation4], 0
    // Predicated region
    $region2: #{tpu_custom_call.1} parent=1 // pred_check
      _
    $region3: #{tpu_custom_call.1} parent=1 // pred_check_branch
      %18 = sbr.rel (0) target = $region5
    $region4: #{tpu_custom_call.1} parent=1 // pred_region
      _
    $region5: #{tpu_custom_call.1} parent=1 // pred_fallthru
      _
    // Predicated region
    $region6: #{tpu_custom_call.1} parent=1 // pred_check
      _
    $region7: #{tpu_custom_call.1} parent=1 // pred_check_branch
      %20 = sbr.rel (0) target = $region9
    $region8: #{tpu_custom_call.1} parent=1 // pred_region
      _
    $region9: #{tpu_custom_call.1} parent=1 // pred_fallthru
      _
    // Predicated region
    $region10: #{tpu_custom_call.1} parent=1 // pred_check
      _
    $region11: #{tpu_custom_call.1} parent=1 // pred_check_branch
      %22 = sbr.rel (0) target = $region13
    $region12: #{tpu_custom_call.1} parent=1 // pred_region
      _
    $region13: #{tpu_custom_call.1} parent=1 // pred_fallthru
      _
    // Predicated region
    $region14: #{tpu_custom_call.1} parent=1 // pred_check
      _
    $region15: #{tpu_custom_call.1} parent=1 // pred_check_branch
      %24 = sbr.rel (0) target = $region17
    $region16: #{tpu_custom_call.1} parent=1 // pred_region
      _
    $region17: #{tpu_custom_call.1} parent=1 // pred_fallthru
      _
    // Predicated region
    $region18: #{tpu_custom_call.1} parent=1 // pred_check
      _
    $region19: #{tpu_custom_call.1} parent=1 // pred_check_branch
      %26 = sbr.rel (0) target = $region21
    $region20: #{tpu_custom_call.1} parent=1 // pred_region
      %s28 = ssub.s32 128, 128
      %29 = vsyncadd [#allocation3], %s28
      %s30 = sshll.u32 [#allocation2], 4
      %s31 = int_to_ptr.vmem [resolvable:$true] %s30
      %36 = dma.hbm_to_vmem [thread:$0]  %s4, 128, %s31, [#allocation3], 64, 64, 4
    $region21: #{tpu_custom_call.1} parent=1 // pred_fallthru
      _
    // Predicated region
    $region22: #{tpu_custom_call.1} parent=1 // pred_check
      _
    $region23: #{tpu_custom_call.1} parent=1 // pred_check_branch
      %38 = sbr.rel (0) target = $region25
    $region24: #{tpu_custom_call.1} parent=1 // pred_region
      _
    $region25: #{tpu_custom_call.1} parent=1 // pred_fallthru
      _
    // Predicated region
    $region26: #{tpu_custom_call.1} parent=1 // pred_check
      _
    $region27: #{tpu_custom_call.1} parent=1 // pred_check_branch
      %40 = sbr.rel (0) target = $region29
    $region28: #{tpu_custom_call.1} parent=1 // pred_region
      _
    $region29: #{tpu_custom_call.1} parent=1 // pred_fallthru
      _
    // Predicated region
    $region30: #{tpu_custom_call.1} parent=1 // pred_check
      _
    $region31: #{tpu_custom_call.1} parent=1 // pred_check_branch
      %42 = sbr.rel (0) target = $region33
    $region32: #{tpu_custom_call.1} parent=1 // pred_region
      _
    $region33: #{tpu_custom_call.1} parent=1 // pred_fallthru
      _
    // Predicated region
    $region34: #{tpu_custom_call.1} parent=1 // pred_check
      _
    $region35: #{tpu_custom_call.1} parent=1 // pred_check_branch
      %44 = sbr.rel (0) target = $region37
    $region36: #{tpu_custom_call.1} parent=1 // pred_region
      _
    $region37: #{tpu_custom_call.1} parent=1 // pred_fallthru
      _
    // Predicated region
    $region38: #{tpu_custom_call.1} parent=1 // pred_check
      _
    $region39: #{tpu_custom_call.1} parent=1 // pred_check_branch
      %46 = sbr.rel (0) target = $region41
    $region40: #{tpu_custom_call.1} parent=1 // pred_region
      _
    $region41: #{tpu_custom_call.1} parent=1 // pred_fallthru
      _
    // Predicated region
    $region42: #{tpu_custom_call.1} parent=1 // pred_check
      _
    $region43: #{tpu_custom_call.1} parent=1 // pred_check_branch
      %48 = sbr.rel (0) target = $region45
    $region44: #{tpu_custom_call.1} parent=1 // pred_region
      %49 = dma.done [#allocation3], 128
    $region45: #{tpu_custom_call.1} parent=1 // pred_fallthru
      _
    %v51 = vld [vmem:[%s0] sm:$0xf]
    %v52 = vld [vmem:[%s0 + $0x4] sm:$0xf]
    %v53 = vld [vmem:[%s0 + $0x8] sm:$0xf]
    %v54 = vld [vmem:[%s0 + $0xc] sm:$0xf]
    %v55 = vld [vmem:[%s0 + $0x10] sm:$0xf]
    %v56 = vld [vmem:[%s0 + $0x14] sm:$0xf]
    %v57 = vld [vmem:[%s0 + $0x18] sm:$0xf]
    %v58 = vld [vmem:[%s0 + $0x1c] sm:$0xf]
    %v59 = vld [vmem:[%s0 + $0x20] sm:$0xf]
    %v60 = vld [vmem:[%s0 + $0x24] sm:$0xf]
    %v61 = vld [vmem:[%s0 + $0x28] sm:$0xf]
    %v62 = vld [vmem:[%s0 + $0x2c] sm:$0xf]
    %v63 = vld [vmem:[%s0 + $0x30] sm:$0xf]
    %v64 = vld [vmem:[%s0 + $0x34] sm:$0xf]
    %v65 = vld [vmem:[%s0 + $0x38] sm:$0xf]
    %v66 = vld [vmem:[%s0 + $0x3c] sm:$0xf]
    %v67 = vld [vmem:[%s2] sm:$0xff]
    %v68 = vld [vmem:[%s2 + $0x8] sm:$0xff]
    %v69 = vld [vmem:[%s2 + $0x10] sm:$0xff]
    %v70 = vld [vmem:[%s2 + $0x18] sm:$0xff]
    %v71 = vld [vmem:[%s3] sm:$0x3]
    %v73 = vlaneseq
    %v74 = vshrl.u32 %v73, 7
    %v75 = vsub.s32 0, %v74
    %v76 = vrot.slane %v71, %v75
    %v77 = vlaneseq
    %v78 = vshrl.u32 %v77, 7
    %v79 = vsub.s32 1, %v78
    %v80 = vrot.slane %v71, %v79
    %v99 = vunpack.c.l.b16 %v51
    %v100 = vunpack.c.l.b16 %v52
    %v101 = vunpack.c.l.b16 %v53
    %v102 = vunpack.c.l.b16 %v54
    %v103 = vunpack.c.l.b16 %v55
    %v104 = vunpack.c.l.b16 %v56
    %v105 = vunpack.c.l.b16 %v57
    %v106 = vunpack.c.l.b16 %v58
    %v107 = vunpack.c.l.b16 %v59
    %v108 = vunpack.c.l.b16 %v60
    %v109 = vunpack.c.l.b16 %v61
    %v110 = vunpack.c.l.b16 %v62
    %v111 = vunpack.c.l.b16 %v63
    %v112 = vunpack.c.l.b16 %v64
    %v113 = vunpack.c.l.b16 %v65
    %v114 = vunpack.c.l.b16 %v66
    %v115 = vpack.c.b16 %v100, %v99
    %v116 = vpack.c.b16 %v102, %v101
    %v117 = vpack.c.b16 %v104, %v103
    %v118 = vpack.c.b16 %v106, %v105
    %v119 = vpack.c.b16 %v108, %v107
    %v120 = vpack.c.b16 %v110, %v109
    %v121 = vpack.c.b16 %v112, %v111
    %v122 = vpack.c.b16 %v114, %v113
    %v127 = vunpack.c.l.b16 %v67
    %v128 = vunpack.c.h.b16 %v67
    %v129 = vunpack.c.l.b16 %v68
    %v130 = vunpack.c.h.b16 %v68
    %v131 = vunpack.c.l.b16 %v69
    %v132 = vunpack.c.h.b16 %v69
    %v133 = vunpack.c.l.b16 %v70
    %v134 = vunpack.c.h.b16 %v70
    %v135 = vpack.c.b16 %v129, %v127
    %v136 = vpack.c.b16 %v130, %v128
    %v137 = vpack.c.b16 %v133, %v131
    %v138 = vpack.c.b16 %v134, %v132
    %vm143 = vcmask 261120
    %v145 = vsel %vm143, %v115, 0
    %v148 = vsel %vm143, %v116, 0
    %v151 = vsel %vm143, %v117, 0
    %v154 = vsel %vm143, %v118, 0
    %v157 = vsel %vm143, %v119, 0
    %v160 = vsel %vm143, %v120, 0
    %v163 = vsel %vm143, %v121, 0
    %v166 = vsel %vm143, %v122, 0
    %168 = vmatprep.subr.bf16.mxu0 %v136
    %169 = vmatpush1.bf16.msra.mxu0 %v135
    %170 = vmatprep.subr.bf16.mxu0 %v138
    %171 = vmatpush1.bf16.msra.mxu0 %v137
    %172 = vmatprep.subr.bf16.mxu0 0
    %173 = vmatpush1.bf16.msra.mxu0 0
    %174 = vmatprep.subr.bf16.mxu0 0
    %175 = vmatpush1.bf16.msra.mxu0 0
    %176 = vmatprep.subr.bf16.mxu0 0
    %177 = vmatpush1.bf16.msra.mxu0 0
    %178 = vmatprep.subr.bf16.mxu0 0
    %179 = vmatpush1.bf16.msra.mxu0 0
    %180 = vmatprep.subr.bf16.mxu0 0
    %181 = vmatpush1.bf16.msra.mxu0 0
    %182 = vmatprep.subr.bf16.mxu0 0
    %183 = vmatpush1.bf16.msra.mxu0 0
    %184 = vmatprep.subr.bf16.mxu0 0
    %185 = vmatpush1.bf16.msra.mxu0 0
    %186 = vmatprep.subr.bf16.mxu0 0
    %187 = vmatpush1.bf16.msra.mxu0 0
    %188 = vmatprep.subr.bf16.mxu0 0
    %189 = vmatpush1.bf16.msra.mxu0 0
    %190 = vmatprep.subr.bf16.mxu0 0
    %191 = vmatpush1.bf16.msra.mxu0 0
    %192 = vmatprep.subr.bf16.mxu0 0
    %193 = vmatpush1.bf16.msra.mxu0 0
    %194 = vmatprep.subr.bf16.mxu0 0
    %195 = vmatpush1.bf16.msra.mxu0 0
    %196 = vmatprep.subr.bf16.mxu0 0
    %197 = vmatpush1.bf16.msra.mxu0 0
    %198 = vmatprep.subr.bf16.mxu0 0
    %199 = vmatpush1.bf16.msra.mxu0 0
    %200 = vmatprep.mubr.bf16.mxu0 0
    %201 = vmatmul.mubr.bf16.gmra.mrb[0].mxu0 %v145
    %v202 = vpop.f32.mrb[0].mxu0
    %v203 = vadd.f32 %v76, %v202
    %v204 = vpop.f32.mrb[0].mxu0
    %v205 = vadd.f32 %v80, %v204
    %v206 = vpop.f32.mrb[0].mxu0
    %v207 = vadd.f32 %v76, %v206
    %v208 = vpop.f32.mrb[0].mxu0
    %v209 = vadd.f32 %v80, %v208
    %210 = vmatprep.mubr.bf16.mxu0 0
    %211 = vmatmul.mubr.bf16.gmra.mrb[0].mxu0 %v148
    %v212 = vpop.f32.mrb[0].mxu0
    %v213 = vadd.f32 %v76, %v212
    %v214 = vpop.f32.mrb[0].mxu0
    %v215 = vadd.f32 %v80, %v214
    %v216 = vpop.f32.mrb[0].mxu0
    %v217 = vadd.f32 %v76, %v216
    %v218 = vpop.f32.mrb[0].mxu0
    %v219 = vadd.f32 %v80, %v218
    %220 = vmatprep.mubr.bf16.mxu0 0
    %221 = vmatmul.mubr.bf16.gmra.mrb[0].mxu0 %v151
    %v222 = vpop.f32.mrb[0].mxu0
    %v223 = vadd.f32 %v76, %v222
    %v224 = vpop.f32.mrb[0].mxu0
    %v225 = vadd.f32 %v80, %v224
    %v226 = vpop.f32.mrb[0].mxu0
    %v227 = vadd.f32 %v76, %v226
    %v228 = vpop.f32.mrb[0].mxu0
    %v229 = vadd.f32 %v80, %v228
    %230 = vmatprep.mubr.bf16.mxu0 0
    %231 = vmatmul.mubr.bf16.gmra.mrb[0].mxu0 %v154
    %v232 = vpop.f32.mrb[0].mxu0
    %v233 = vadd.f32 %v76, %v232
    %v234 = vpop.f32.mrb[0].mxu0
    %v235 = vadd.f32 %v80, %v234
    %v236 = vpop.f32.mrb[0].mxu0
    %v237 = vadd.f32 %v76, %v236
    %v238 = vpop.f32.mrb[0].mxu0
    %v239 = vadd.f32 %v80, %v238
    %240 = vmatprep.mubr.bf16.mxu0 0
    %241 = vmatmul.mubr.bf16.gmra.mrb[0].mxu0 %v157
    %v242 = vpop.f32.mrb[0].mxu0
    %v243 = vadd.f32 %v76, %v242
    %v244 = vpop.f32.mrb[0].mxu0
    %v245 = vadd.f32 %v80, %v244
    %v246 = vpop.f32.mrb[0].mxu0
    %v247 = vadd.f32 %v76, %v246
    %v248 = vpop.f32.mrb[0].mxu0
    %v249 = vadd.f32 %v80, %v248
    %250 = vmatprep.mubr.bf16.mxu0 0
    %251 = vmatmul.mubr.bf16.gmra.mrb[0].mxu0 %v160
    %v252 = vpop.f32.mrb[0].mxu0
    %v253 = vadd.f32 %v76, %v252
    %v254 = vpop.f32.mrb[0].mxu0
    %v255 = vadd.f32 %v80, %v254
    %v256 = vpop.f32.mrb[0].mxu0
    %v257 = vadd.f32 %v76, %v256
    %v258 = vpop.f32.mrb[0].mxu0
    %v259 = vadd.f32 %v80, %v258
    %260 = vmatprep.mubr.bf16.mxu0 0
    %261 = vmatmul.mubr.bf16.gmra.mrb[0].mxu0 %v163
    %v262 = vpop.f32.mrb[0].mxu0
    %v263 = vadd.f32 %v76, %v262
    %v264 = vpop.f32.mrb[0].mxu0
    %v265 = vadd.f32 %v80, %v264
    %v266 = vpop.f32.mrb[0].mxu0
    %v267 = vadd.f32 %v76, %v266
    %v268 = vpop.f32.mrb[0].mxu0
    %v269 = vadd.f32 %v80, %v268
    %270 = vmatprep.mubr.bf16.mxu0 0
    %271 = vmatmul.mubr.bf16.gmra.mrb[0].mxu0 %v166
    %v272 = vpop.f32.mrb[0].mxu0
    %v273 = vadd.f32 %v76, %v272
    %v274 = vpop.f32.mrb[0].mxu0
    %v275 = vadd.f32 %v80, %v274
    %v276 = vpop.f32.mrb[0].mxu0
    %v277 = vadd.f32 %v76, %v276
    %v278 = vpop.f32.mrb[0].mxu0
    %v279 = vadd.f32 %v80, %v278
    %280 = vdwg.mxu0
    %v281 = vmul.f32 %v203, 0.5
    %v282 = vmul.f32 %v207, 0.5
    %v283 = vmul.f32 %v213, 0.5
    %v284 = vmul.f32 %v217, 0.5
    %v285 = vmul.f32 %v223, 0.5
    %v286 = vmul.f32 %v227, 0.5
    %v287 = vmul.f32 %v233, 0.5
    %v288 = vmul.f32 %v237, 0.5
    %v289 = vmul.f32 %v243, 0.5
    %v290 = vmul.f32 %v247, 0.5
    %v291 = vmul.f32 %v253, 0.5
    %v292 = vmul.f32 %v257, 0.5
    %v293 = vmul.f32 %v263, 0.5
    %v294 = vmul.f32 %v267, 0.5
    %v295 = vmul.f32 %v273, 0.5
    %v296 = vmul.f32 %v277, 0.5
    %v297 = vmul.f32 %v203, 0.70710677
    %v298 = vmul.f32 %v207, 0.70710677
    %v299 = vmul.f32 %v213, 0.70710677
    %v300 = vmul.f32 %v217, 0.70710677
    %v301 = vmul.f32 %v223, 0.70710677
    %v302 = vmul.f32 %v227, 0.70710677
    %v303 = vmul.f32 %v233, 0.70710677
    %v304 = vmul.f32 %v237, 0.70710677
    %v305 = vmul.f32 %v243, 0.70710677
    %v306 = vmul.f32 %v247, 0.70710677
    %v307 = vmul.f32 %v253, 0.70710677
    %v308 = vmul.f32 %v257, 0.70710677
    %v309 = vmul.f32 %v263, 0.70710677
    %v310 = vmul.f32 %v267, 0.70710677
    %v311 = vmul.f32 %v273, 0.70710677
    %v312 = vmul.f32 %v277, 0.70710677
    %v313 = verf.f32.pop %v297
    %v314 = verf.f32.pop %v298
    %v315 = verf.f32.pop %v299
    %v316 = verf.f32.pop %v300
    %v317 = verf.f32.pop %v301
    %v318 = verf.f32.pop %v302
    %v319 = verf.f32.pop %v303
    %v320 = verf.f32.pop %v304
    %v321 = verf.f32.pop %v305
    %v322 = verf.f32.pop %v306
    %v323 = verf.f32.pop %v307
    %v324 = verf.f32.pop %v308
    %v325 = verf.f32.pop %v309
    %v326 = verf.f32.pop %v310
    %v327 = verf.f32.pop %v311
    %v328 = verf.f32.pop %v312
    %v329 = vadd.f32 %v313, 1.0
    %v330 = vadd.f32 %v314, 1.0
    %v331 = vadd.f32 %v315, 1.0
    %v332 = vadd.f32 %v316, 1.0
    %v333 = vadd.f32 %v317, 1.0
    %v334 = vadd.f32 %v318, 1.0
    %v335 = vadd.f32 %v319, 1.0
    %v336 = vadd.f32 %v320, 1.0
    %v337 = vadd.f32 %v321, 1.0
    %v338 = vadd.f32 %v322, 1.0
    %v339 = vadd.f32 %v323, 1.0
    %v340 = vadd.f32 %v324, 1.0
    %v341 = vadd.f32 %v325, 1.0
    %v342 = vadd.f32 %v326, 1.0
    %v343 = vadd.f32 %v327, 1.0
    %v344 = vadd.f32 %v328, 1.0
    %v345 = vmul.f32 %v281, %v329
    %v346 = vmul.f32 %v282, %v330
    %v347 = vmul.f32 %v283, %v331
    %v348 = vmul.f32 %v284, %v332
    %v349 = vmul.f32 %v285, %v333
    %v350 = vmul.f32 %v286, %v334
    %v351 = vmul.f32 %v287, %v335
    %v352 = vmul.f32 %v288, %v336
    %v353 = vmul.f32 %v289, %v337
    %v354 = vmul.f32 %v290, %v338
    %v355 = vmul.f32 %v291, %v339
    %v356 = vmul.f32 %v292, %v340
    %v357 = vmul.f32 %v293, %v341
    %v358 = vmul.f32 %v294, %v342
    %v359 = vmul.f32 %v295, %v343
    %v360 = vmul.f32 %v296, %v344
    %v361 = vsel %vm143, %v205, 0.0
    %v362 = vsel %vm143, %v209, 0.0
    %v363 = vadd.f32 %v361, %v362
    %v364 = vsel %vm143, %v215, 0.0
    %v365 = vadd.f32 %v363, %v364
    %v366 = vsel %vm143, %v219, 0.0
    %v367 = vadd.f32 %v365, %v366
    %v368 = vsel %vm143, %v225, 0.0
    %v369 = vadd.f32 %v367, %v368
    %v370 = vsel %vm143, %v229, 0.0
    %v371 = vadd.f32 %v369, %v370
    %v372 = vsel %vm143, %v235, 0.0
    %v373 = vadd.f32 %v371, %v372
    %v374 = vsel %vm143, %v239, 0.0
    %v375 = vadd.f32 %v373, %v374
    %v376 = vrot.slane %v375, 4
    %v377 = vadd.f32 %v375, %v376
    %v378 = vrot.slane %v377, 2
    %v379 = vadd.f32 %v377, %v378
    %v380 = vrot.slane %v379, 1
    %v381 = vadd.f32 %v379, %v380
    %v382 = vsel %vm143, %v245, 0.0
    %v383 = vsel %vm143, %v249, 0.0
    %v384 = vadd.f32 %v382, %v383
    %v385 = vsel %vm143, %v255, 0.0
    %v386 = vadd.f32 %v384, %v385
    %v387 = vsel %vm143, %v259, 0.0
    %v388 = vadd.f32 %v386, %v387
    %v389 = vsel %vm143, %v265, 0.0
    %v390 = vadd.f32 %v388, %v389
    %v391 = vsel %vm143, %v269, 0.0
    %v392 = vadd.f32 %v390, %v391
    %v393 = vsel %vm143, %v275, 0.0
    %v394 = vadd.f32 %v392, %v393
    %v395 = vsel %vm143, %v279, 0.0
    %v396 = vadd.f32 %v394, %v395
    %v397 = vrot.slane %v396, 4
    %v398 = vadd.f32 %v396, %v397
    %v399 = vrot.slane %v398, 2
    %v400 = vadd.f32 %v398, %v399
    %v401 = vrot.slane %v400, 1
    %v402 = vadd.f32 %v400, %v401
    %v403 = vrcp.pop 64.0
    %v404 = vmul.f32 %v381, %v403
    %v405 = vmul.f32 %v402, %v403
    %v406 = vsub.f32 %v205, %v404
    %v407 = vsub.f32 %v209, %v404
    %v408 = vsub.f32 %v215, %v404
    %v409 = vsub.f32 %v219, %v404
    %v410 = vsub.f32 %v225, %v404
    %v411 = vsub.f32 %v229, %v404
    %v412 = vsub.f32 %v235, %v404
    %v413 = vsub.f32 %v239, %v404
    %v414 = vsub.f32 %v245, %v405
    %v415 = vsub.f32 %v249, %v405
    %v416 = vsub.f32 %v255, %v405
    %v417 = vsub.f32 %v259, %v405
    %v418 = vsub.f32 %v265, %v405
    %v419 = vsub.f32 %v269, %v405
    %v420 = vsub.f32 %v275, %v405
    %v421 = vsub.f32 %v279, %v405
    %v422 = vmul.f32 %v406, %v406
    %v423 = vmul.f32 %v407, %v407
    %v424 = vmul.f32 %v408, %v408
    %v425 = vmul.f32 %v409, %v409
    %v426 = vmul.f32 %v410, %v410
    %v427 = vmul.f32 %v411, %v411
    %v428 = vmul.f32 %v412, %v412
    %v429 = vmul.f32 %v413, %v413
    %v430 = vmul.f32 %v414, %v414
    %v431 = vmul.f32 %v415, %v415
    %v432 = vmul.f32 %v416, %v416
    %v433 = vmul.f32 %v417, %v417
    %v434 = vmul.f32 %v418, %v418
    %v435 = vmul.f32 %v419, %v419
    %v436 = vmul.f32 %v420, %v420
    %v437 = vmul.f32 %v421, %v421
    %v438 = vsel %vm143, %v422, 0.0
    %v439 = vsel %vm143, %v423, 0.0
    %v440 = vadd.f32 %v438, %v439
    %v441 = vsel %vm143, %v424, 0.0
    %v442 = vadd.f32 %v440, %v441
    %v443 = vsel %vm143, %v425, 0.0
    %v444 = vadd.f32 %v442, %v443
    %v445 = vsel %vm143, %v426, 0.0
    %v446 = vadd.f32 %v444, %v445
    %v447 = vsel %vm143, %v427, 0.0
    %v448 = vadd.f32 %v446, %v447
    %v449 = vsel %vm143, %v428, 0.0
    %v450 = vadd.f32 %v448, %v449
    %v451 = vsel %vm143, %v429, 0.0
    %v452 = vadd.f32 %v450, %v451
    %v453 = vrot.slane %v452, 4
    %v454 = vadd.f32 %v452, %v453
    %v455 = vrot.slane %v454, 2
    %v456 = vadd.f32 %v454, %v455
    %v457 = vrot.slane %v456, 1
    %v458 = vadd.f32 %v456, %v457
    %v459 = vsel %vm143, %v430, 0.0
    %v460 = vsel %vm143, %v431, 0.0
    %v461 = vadd.f32 %v459, %v460
    %v462 = vsel %vm143, %v432, 0.0
    %v463 = vadd.f32 %v461, %v462
    %v464 = vsel %vm143, %v433, 0.0
    %v465 = vadd.f32 %v463, %v464
    %v466 = vsel %vm143, %v434, 0.0
    %v467 = vadd.f32 %v465, %v466
    %v468 = vsel %vm143, %v435, 0.0
    %v469 = vadd.f32 %v467, %v468
    %v470 = vsel %vm143, %v436, 0.0
    %v471 = vadd.f32 %v469, %v470
    %v472 = vsel %vm143, %v437, 0.0
    %v473 = vadd.f32 %v471, %v472
    %v474 = vrot.slane %v473, 4
    %v475 = vadd.f32 %v473, %v474
    %v476 = vrot.slane %v475, 2
    %v477 = vadd.f32 %v475, %v476
    %v478 = vrot.slane %v477, 1
    %v479 = vadd.f32 %v477, %v478
    %v480 = vmul.f32 %v458, %v403
    %v481 = vmul.f32 %v479, %v403
    %v482 = vadd.f32 %v480, 1e-05
    %v483 = vadd.f32 %v481, 1e-05
    %v484 = vrsqrt.pop %v482
    %v485 = vrsqrt.pop %v483
    %v486 = vmul.f32 %v406, %v484
    %v487 = vmul.f32 %v407, %v484
    %v488 = vmul.f32 %v408, %v484
    %v489 = vmul.f32 %v409, %v484
    %v490 = vmul.f32 %v410, %v484
    %v491 = vmul.f32 %v411, %v484
    %v492 = vmul.f32 %v412, %v484
    %v493 = vmul.f32 %v413, %v484
    %v494 = vmul.f32 %v414, %v485
    %v495 = vmul.f32 %v415, %v485
    %v496 = vmul.f32 %v416, %v485
    %v497 = vmul.f32 %v417, %v485
    %v498 = vmul.f32 %v418, %v485
    %v499 = vmul.f32 %v419, %v485
    %v500 = vmul.f32 %v420, %v485
    %v501 = vmul.f32 %v421, %v485
    %v502 = vld [vmem:[%s1] sm:$0xf]
    %v503 = vld [vmem:[%s1 + $0x4] sm:$0xf]
    %v504 = vld [vmem:[#allocation2] sm:$0xf]
    %v505 = vld [vmem:[#allocation2 + $0x4] sm:$0xf]
    %v506 = vld [vmem:[%s5] sm:$0x1]
    %v508 = vlaneseq
    %v509 = vshrl.u32 %v508, 7
    %v510 = vsub.s32 0, %v509
    %v511 = vrot.slane %v506, %v510
    %v515 = vunpack.c.l.b16 %v502
    %v516 = vunpack.c.l.b16 %v503
    %v517 = vpack.c.b16 %v516, %v515
    %v520 = vunpack.c.l.b16 %v504
    %v521 = vunpack.c.l.b16 %v505
    %v522 = vpack.c.b16 %v521, %v520
    %vm524 = vcmask 130048
    %v526 = vsel %vm524, %v517, 0
    %528 = vmatprep.subr.bf16.mxu0 0
    %529 = vmatpush1.bf16.msra.mxu0 %v522
    %530 = vmatprep.subr.bf16.mxu0 0
    %531 = vmatpush1.bf16.msra.mxu0 0
    %532 = vmatprep.subr.bf16.mxu0 0
    %533 = vmatpush1.bf16.msra.mxu0 0
    %534 = vmatprep.subr.bf16.mxu0 0
    %535 = vmatpush1.bf16.msra.mxu0 0
    %536 = vmatprep.subr.bf16.mxu0 0
    %537 = vmatpush1.bf16.msra.mxu0 0
    %538 = vmatprep.subr.bf16.mxu0 0
    %539 = vmatpush1.bf16.msra.mxu0 0
    %540 = vmatprep.subr.bf16.mxu0 0
    %541 = vmatpush1.bf16.msra.mxu0 0
    %542 = vmatprep.subr.bf16.mxu0 0
    %543 = vmatpush1.bf16.msra.mxu0 0
    %544 = vmatprep.subr.bf16.mxu0 0
    %545 = vmatpush1.bf16.msra.mxu0 0
    %546 = vmatprep.subr.bf16.mxu0 0
    %547 = vmatpush1.bf16.msra.mxu0 0
    %548 = vmatprep.subr.bf16.mxu0 0
    %549 = vmatpush1.bf16.msra.mxu0 0
    %550 = vmatprep.subr.bf16.mxu0 0
    %551 = vmatpush1.bf16.msra.mxu0 0
    %552 = vmatprep.subr.bf16.mxu0 0
    %553 = vmatpush1.bf16.msra.mxu0 0
    %554 = vmatprep.subr.bf16.mxu0 0
    %555 = vmatpush1.bf16.msra.mxu0 0
    %556 = vmatprep.subr.bf16.mxu0 0
    %557 = vmatpush1.bf16.msra.mxu0 0
    %558 = vmatprep.subr.bf16.mxu0 0
    %559 = vmatpush1.bf16.msra.mxu0 0
    %560 = vmatprep.mubr.bf16.mxu0 0
    %561 = vmatmul.mubr.bf16.gmra.mrb[0].mxu0 %v526
    %v562 = vpop.f32.mrb[0].mxu0
    %v563 = vadd.f32 %v511, %v562
    %v564 = vpop.f32.mrb[0].mxu0
    %v565 = vpop.f32.mrb[0].mxu0
    %v566 = vadd.f32 %v511, %v565
    %v567 = vpop.f32.mrb[0].mxu0
    %568 = vdwg.mxu0
    %v569 = vpack.c.bf16 %v487, %v486
    %v570 = vpack.c.bf16 %v489, %v488
    %v571 = vpack.c.bf16 %v491, %v490
    %v572 = vpack.c.bf16 %v493, %v492
    %v573 = vpack.c.bf16 %v495, %v494
    %v574 = vpack.c.bf16 %v497, %v496
    %v575 = vpack.c.bf16 %v499, %v498
    %v576 = vpack.c.bf16 %v501, %v500
    %v577 = vpack.c.bf16 %v563, %v563
    %v578 = vpack.c.bf16 %v566, %v566
    %v580 = vsel %vm524, %v569, 0
    %v583 = vsel %vm524, %v570, 0
    %v586 = vsel %vm524, %v571, 0
    %v589 = vsel %vm524, %v572, 0
    %v592 = vsel %vm524, %v577, 0
    %594 = vmatprep.subr.bf16.mxu0 0
    %595 = vmatpush1.bf16.xpose.msra.mxu0 %v592
    %596 = vmatprep.subr.bf16.mxu0 0
    %597 = vmatpush1.bf16.xpose.msra.mxu0 0
    %598 = vmatprep.subr.bf16.mxu0 0
    %599 = vmatpush1.bf16.xpose.msra.mxu0 0
    %600 = vmatprep.subr.bf16.mxu0 0
    %601 = vmatpush1.bf16.xpose.msra.mxu0 0
    %602 = vmatprep.subr.bf16.mxu0 0
    %603 = vmatpush1.bf16.xpose.msra.mxu0 0
    %604 = vmatprep.subr.bf16.mxu0 0
    %605 = vmatpush1.bf16.xpose.msra.mxu0 0
    %606 = vmatprep.subr.bf16.mxu0 0
    %607 = vmatpush1.bf16.xpose.msra.mxu0 0
    %608 = vmatprep.subr.bf16.mxu0 0
    %609 = vmatpush1.bf16.xpose.msra.mxu0 0
    %610 = vmatprep.subr.bf16.mxu0 0
    %611 = vmatpush1.bf16.xpose.msra.mxu0 0
    %612 = vmatprep.subr.bf16.mxu0 0
    %613 = vmatpush1.bf16.xpose.msra.mxu0 0
    %614 = vmatprep.subr.bf16.mxu0 0
    %615 = vmatpush1.bf16.xpose.msra.mxu0 0
    %616 = vmatprep.subr.bf16.mxu0 0
    %617 = vmatpush1.bf16.xpose.msra.mxu0 0
    %618 = vmatprep.subr.bf16.mxu0 0
    %619 = vmatpush1.bf16.xpose.msra.mxu0 0
    %620 = vmatprep.subr.bf16.mxu0 0
    %621 = vmatpush1.bf16.xpose.msra.mxu0 0
    %622 = vmatprep.subr.bf16.mxu0 0
    %623 = vmatpush1.bf16.xpose.msra.mxu0 0
    %624 = vmatprep.subr.bf16.mxu0 0
    %625 = vmatpush1.bf16.xpose.msra.mxu0 0
    %626 = vmatprep.mubr.bf16.mxu0 0
    %627 = vmatmul.mubr.bf16.gmra.mrb[0].mxu0 %v580
    %v628 = vpop.f32.mrb[0].mxu0
    %v629 = vadd.f32 0.0, %v628
    %v630 = vpop.f32.mrb[0].mxu0
    %v631 = vpop.f32.mrb[0].mxu0
    %v632 = vadd.f32 0.0, %v631
    %v633 = vpop.f32.mrb[0].mxu0
    %634 = vmatprep.mubr.bf16.mxu0 0
    %635 = vmatmul.mubr.bf16.gmra.mrb[0].mxu0 %v583
    %v636 = vpop.f32.mrb[0].mxu0
    %v637 = vadd.f32 0.0, %v636
    %v638 = vpop.f32.mrb[0].mxu0
    %v639 = vpop.f32.mrb[0].mxu0
    %v640 = vadd.f32 0.0, %v639
    %v641 = vpop.f32.mrb[0].mxu0
    %642 = vmatprep.mubr.bf16.mxu0 0
    %643 = vmatmul.mubr.bf16.gmra.mrb[0].mxu0 %v586
    %v644 = vpop.f32.mrb[0].mxu0
    %v645 = vadd.f32 0.0, %v644
    %v646 = vpop.f32.mrb[0].mxu0
    %v647 = vpop.f32.mrb[0].mxu0
    %v648 = vadd.f32 0.0, %v647
    %v649 = vpop.f32.mrb[0].mxu0
    %650 = vmatprep.mubr.bf16.mxu0 0
    %651 = vmatmul.mubr.bf16.gmra.mrb[0].mxu0 %v589
    %v652 = vpop.f32.mrb[0].mxu0
    %v653 = vadd.f32 0.0, %v652
    %v654 = vpop.f32.mrb[0].mxu0
    %v655 = vpop.f32.mrb[0].mxu0
    %v656 = vadd.f32 0.0, %v655
    %v657 = vpop.f32.mrb[0].mxu0
    %658 = vdwg.mxu0
    %v660 = vsel %vm524, %v573, 0
    %v663 = vsel %vm524, %v574, 0
    %v666 = vsel %vm524, %v575, 0
    %v669 = vsel %vm524, %v576, 0
    %v672 = vsel %vm524, %v578, 0
    %674 = vmatprep.subr.bf16.mxu0 0
    %675 = vmatpush1.bf16.xpose.msra.mxu0 %v672
    %676 = vmatprep.subr.bf16.mxu0 0
    %677 = vmatpush1.bf16.xpose.msra.mxu0 0
    %678 = vmatprep.subr.bf16.mxu0 0
    %679 = vmatpush1.bf16.xpose.msra.mxu0 0
    %680 = vmatprep.subr.bf16.mxu0 0
    %681 = vmatpush1.bf16.xpose.msra.mxu0 0
    %682 = vmatprep.subr.bf16.mxu0 0
    %683 = vmatpush1.bf16.xpose.msra.mxu0 0
    %684 = vmatprep.subr.bf16.mxu0 0
    %685 = vmatpush1.bf16.xpose.msra.mxu0 0
    %686 = vmatprep.subr.bf16.mxu0 0
    %687 = vmatpush1.bf16.xpose.msra.mxu0 0
    %688 = vmatprep.subr.bf16.mxu0 0
    %689 = vmatpush1.bf16.xpose.msra.mxu0 0
    %690 = vmatprep.subr.bf16.mxu0 0
    %691 = vmatpush1.bf16.xpose.msra.mxu0 0
    %692 = vmatprep.subr.bf16.mxu0 0
    %693 = vmatpush1.bf16.xpose.msra.mxu0 0
    %694 = vmatprep.subr.bf16.mxu0 0
    %695 = vmatpush1.bf16.xpose.msra.mxu0 0
    %696 = vmatprep.subr.bf16.mxu0 0
    %697 = vmatpush1.bf16.xpose.msra.mxu0 0
    %698 = vmatprep.subr.bf16.mxu0 0
    %699 = vmatpush1.bf16.xpose.msra.mxu0 0
    %700 = vmatprep.subr.bf16.mxu0 0
    %701 = vmatpush1.bf16.xpose.msra.mxu0 0
    %702 = vmatprep.subr.bf16.mxu0 0
    %703 = vmatpush1.bf16.xpose.msra.mxu0 0
    %704 = vmatprep.subr.bf16.mxu0 0
    %705 = vmatpush1.bf16.xpose.msra.mxu0 0
    %706 = vmatprep.mubr.bf16.mxu0 0
    %707 = vmatmul.mubr.bf16.gmra.mrb[0].mxu0 %v660
    %v708 = vpop.f32.mrb[0].mxu0
    %v709 = vadd.f32 0.0, %v708
    %v710 = vpop.f32.mrb[0].mxu0
    %v711 = vpop.f32.mrb[0].mxu0
    %v712 = vadd.f32 0.0, %v711
    %v713 = vpop.f32.mrb[0].mxu0
    %714 = vmatprep.mubr.bf16.mxu0 0
    %715 = vmatmul.mubr.bf16.gmra.mrb[0].mxu0 %v663
    %v716 = vpop.f32.mrb[0].mxu0
    %v717 = vadd.f32 0.0, %v716
    %v718 = vpop.f32.mrb[0].mxu0
    %v719 = vpop.f32.mrb[0].mxu0
    %v720 = vadd.f32 0.0, %v719
    %v721 = vpop.f32.mrb[0].mxu0
    %722 = vmatprep.mubr.bf16.mxu0 0
    %723 = vmatmul.mubr.bf16.gmra.mrb[0].mxu0 %v666
    %v724 = vpop.f32.mrb[0].mxu0
    %v725 = vadd.f32 0.0, %v724
    %v726 = vpop.f32.mrb[0].mxu0
    %v727 = vpop.f32.mrb[0].mxu0
    %v728 = vadd.f32 0.0, %v727
    %v729 = vpop.f32.mrb[0].mxu0
    %730 = vmatprep.mubr.bf16.mxu0 0
    %731 = vmatmul.mubr.bf16.gmra.mrb[0].mxu0 %v669
    %v732 = vpop.f32.mrb[0].mxu0
    %v733 = vadd.f32 0.0, %v732
    %v734 = vpop.f32.mrb[0].mxu0
    %v735 = vpop.f32.mrb[0].mxu0
    %v736 = vadd.f32 0.0, %v735
    %v737 = vpop.f32.mrb[0].mxu0
    %738 = vdwg.mxu0
    %vm739 = vcmask 64512
    %v740 = vsel %vm739, %v629, -inf
    %741 = vmax.xlane.f32.xlu0 %v740
    %v742 = vpop.xlane.xlu0 %741
    %v743 = vsel %vm739, %v632, -inf
    %744 = vmax.xlane.f32.xlu0 %v743
    %v745 = vpop.xlane.xlu0 %744
    %v746 = vsel %vm739, %v637, -inf
    %747 = vmax.xlane.f32.xlu0 %v746
    %v748 = vpop.xlane.xlu0 %747
    %v749 = vsel %vm739, %v640, -inf
    %750 = vmax.xlane.f32.xlu0 %v749
    %v751 = vpop.xlane.xlu0 %750
    %v752 = vsel %vm739, %v645, -inf
    %753 = vmax.xlane.f32.xlu0 %v752
    %v754 = vpop.xlane.xlu0 %753
    %v755 = vsel %vm739, %v648, -inf
    %756 = vmax.xlane.f32.xlu0 %v755
    %v757 = vpop.xlane.xlu0 %756
    %v758 = vsel %vm739, %v653, -inf
    %759 = vmax.xlane.f32.xlu0 %v758
    %v760 = vpop.xlane.xlu0 %759
    %v761 = vsel %vm739, %v656, -inf
    %762 = vmax.xlane.f32.xlu0 %v761
    %v763 = vpop.xlane.xlu0 %762
    %v764 = vsel %vm739, %v709, -inf
    %765 = vmax.xlane.f32.xlu0 %v764
    %v766 = vpop.xlane.xlu0 %765
    %v767 = vsel %vm739, %v712, -inf
    %768 = vmax.xlane.f32.xlu0 %v767
    %v769 = vpop.xlane.xlu0 %768
    %v770 = vsel %vm739, %v717, -inf
    %771 = vmax.xlane.f32.xlu0 %v770
    %v772 = vpop.xlane.xlu0 %771
    %v773 = vsel %vm739, %v720, -inf
    %774 = vmax.xlane.f32.xlu0 %v773
    %v775 = vpop.xlane.xlu0 %774
    %v776 = vsel %vm739, %v725, -inf
    %777 = vmax.xlane.f32.xlu0 %v776
    %v778 = vpop.xlane.xlu0 %777
    %v779 = vsel %vm739, %v728, -inf
    %780 = vmax.xlane.f32.xlu0 %v779
    %v781 = vpop.xlane.xlu0 %780
    %v782 = vsel %vm739, %v733, -inf
    %783 = vmax.xlane.f32.xlu0 %v782
    %v784 = vpop.xlane.xlu0 %783
    %v785 = vsel %vm739, %v736, -inf
    %786 = vmax.xlane.f32.xlu0 %v785
    %v787 = vpop.xlane.xlu0 %786
    %v788 = vsub.f32 %v629, %v742
    %v789 = vsub.f32 %v632, %v745
    %v790 = vsub.f32 %v637, %v748
    %v791 = vsub.f32 %v640, %v751
    %v792 = vsub.f32 %v645, %v754
    %v793 = vsub.f32 %v648, %v757
    %v794 = vsub.f32 %v653, %v760
    %v795 = vsub.f32 %v656, %v763
    %v796 = vsub.f32 %v709, %v766
    %v797 = vsub.f32 %v712, %v769
    %v798 = vsub.f32 %v717, %v772
    %v799 = vsub.f32 %v720, %v775
    %v800 = vsub.f32 %v725, %v778
    %v801 = vsub.f32 %v728, %v781
    %v802 = vsub.f32 %v733, %v784
    %v803 = vsub.f32 %v736, %v787
    %v804 = vmul.f32 %v788, 1.442695
    %v805 = vpow.pop %v804
    %v806 = vmul.f32 %v789, 1.442695
    %v807 = vpow.pop %v806
    %v808 = vmul.f32 %v790, 1.442695
    %v809 = vpow.pop %v808
    %v810 = vmul.f32 %v791, 1.442695
    %v811 = vpow.pop %v810
    %v812 = vmul.f32 %v792, 1.442695
    %v813 = vpow.pop %v812
    %v814 = vmul.f32 %v793, 1.442695
    %v815 = vpow.pop %v814
    %v816 = vmul.f32 %v794, 1.442695
    %v817 = vpow.pop %v816
    %v818 = vmul.f32 %v795, 1.442695
    %v819 = vpow.pop %v818
    %v820 = vmul.f32 %v796, 1.442695
    %v821 = vpow.pop %v820
    %v822 = vmul.f32 %v797, 1.442695
    %v823 = vpow.pop %v822
    %v824 = vmul.f32 %v798, 1.442695
    %v825 = vpow.pop %v824
    %v826 = vmul.f32 %v799, 1.442695
    %v827 = vpow.pop %v826
    %v828 = vmul.f32 %v800, 1.442695
    %v829 = vpow.pop %v828
    %v830 = vmul.f32 %v801, 1.442695
    %v831 = vpow.pop %v830
    %v832 = vmul.f32 %v802, 1.442695
    %v833 = vpow.pop %v832
    %v834 = vmul.f32 %v803, 1.442695
    %v835 = vpow.pop %v834
    %v836 = vsel %vm739, %v805, 0.0
    %837 = vadd.xlane.f32.xlu0 %v836
    %v838 = vpop.xlane.xlu0 %837
    %v839 = vsel %vm739, %v807, 0.0
    %840 = vadd.xlane.f32.xlu0 %v839
    %v841 = vpop.xlane.xlu0 %840
    %v842 = vsel %vm739, %v809, 0.0
    %843 = vadd.xlane.f32.xlu0 %v842
    %v844 = vpop.xlane.xlu0 %843
    %v845 = vsel %vm739, %v811, 0.0
    %846 = vadd.xlane.f32.xlu0 %v845
    %v847 = vpop.xlane.xlu0 %846
    %v848 = vsel %vm739, %v813, 0.0
    %849 = vadd.xlane.f32.xlu0 %v848
    %v850 = vpop.xlane.xlu0 %849
    %v851 = vsel %vm739, %v815, 0.0
    %852 = vadd.xlane.f32.xlu0 %v851
    %v853 = vpop.xlane.xlu0 %852
    %v854 = vsel %vm739, %v817, 0.0
    %855 = vadd.xlane.f32.xlu0 %v854
    %v856 = vpop.xlane.xlu0 %855
    %v857 = vsel %vm739, %v819, 0.0
    %858 = vadd.xlane.f32.xlu0 %v857
    %v859 = vpop.xlane.xlu0 %858
    %v860 = vsel %vm739, %v821, 0.0
    %861 = vadd.xlane.f32.xlu0 %v860
    %v862 = vpop.xlane.xlu0 %861
    %v863 = vsel %vm739, %v823, 0.0
    %864 = vadd.xlane.f32.xlu0 %v863
    %v865 = vpop.xlane.xlu0 %864
    %v866 = vsel %vm739, %v825, 0.0
    %867 = vadd.xlane.f32.xlu0 %v866
    %v868 = vpop.xlane.xlu0 %867
    %v869 = vsel %vm739, %v827, 0.0
    %870 = vadd.xlane.f32.xlu0 %v869
    %v871 = vpop.xlane.xlu0 %870
    %v872 = vsel %vm739, %v829, 0.0
    %873 = vadd.xlane.f32.xlu0 %v872
    %v874 = vpop.xlane.xlu0 %873
    %v875 = vsel %vm739, %v831, 0.0
    %876 = vadd.xlane.f32.xlu0 %v875
    %v877 = vpop.xlane.xlu0 %876
    %v878 = vsel %vm739, %v833, 0.0
    %879 = vadd.xlane.f32.xlu0 %v878
    %v880 = vpop.xlane.xlu0 %879
    %v881 = vsel %vm739, %v835, 0.0
    %882 = vadd.xlane.f32.xlu0 %v881
    %v883 = vpop.xlane.xlu0 %882
    %v884 = vrcp.pop %v838
    %v885 = vrcp.pop %v841
    %v886 = vrcp.pop %v844
    %v887 = vrcp.pop %v847
    %v888 = vrcp.pop %v850
    %v889 = vrcp.pop %v853
    %v890 = vrcp.pop %v856
    %v891 = vrcp.pop %v859
    %v892 = vrcp.pop %v862
    %v893 = vrcp.pop %v865
    %v894 = vrcp.pop %v868
    %v895 = vrcp.pop %v871
    %v896 = vrcp.pop %v874
    %v897 = vrcp.pop %v877
    %v898 = vrcp.pop %v880
    %v899 = vrcp.pop %v883
    %v900 = vmul.f32 %v805, %v884
    %v901 = vmul.f32 %v807, %v885
    %v902 = vmul.f32 %v809, %v886
    %v903 = vmul.f32 %v811, %v887
    %v904 = vmul.f32 %v813, %v888
    %v905 = vmul.f32 %v815, %v889
    %v906 = vmul.f32 %v817, %v890
    %v907 = vmul.f32 %v819, %v891
    %v908 = vmul.f32 %v821, %v892
    %v909 = vmul.f32 %v823, %v893
    %v910 = vmul.f32 %v825, %v894
    %v911 = vmul.f32 %v827, %v895
    %v912 = vmul.f32 %v829, %v896
    %v913 = vmul.f32 %v831, %v897
    %v914 = vmul.f32 %v833, %v898
    %v915 = vmul.f32 %v835, %v899
    %v916 = vpack.c.bf16 %v901, %v900
    %v917 = vpack.c.bf16 %v903, %v902
    %v918 = vpack.c.bf16 %v905, %v904
    %v919 = vpack.c.bf16 %v907, %v906
    %v920 = vpack.c.bf16 %v909, %v908
    %v921 = vpack.c.bf16 %v911, %v910
    %v922 = vpack.c.bf16 %v913, %v912
    %v923 = vpack.c.bf16 %v915, %v914
    %925 = vrot.lane.b32.xlu0 %v577, 96
    %v926 = vpop.permute.xlu0 %925
    %v928 = vsel %vm739, %v916, 0
    %v931 = vsel %vm739, %v917, 0
    %v934 = vsel %vm739, %v918, 0
    %v937 = vsel %vm739, %v919, 0
    %vm939 = vcmask 1043456
    %v941 = vsel %vm939, %v926, 0
    %943 = vmatprep.subr.bf16.mxu0 0
    %944 = vmatpush1.bf16.msra.mxu0 %v941
    %945 = vmatprep.subr.bf16.mxu0 0
    %946 = vmatpush1.bf16.msra.mxu0 0
    %947 = vmatprep.subr.bf16.mxu0 0
    %948 = vmatpush1.bf16.msra.mxu0 0
    %949 = vmatprep.subr.bf16.mxu0 0
    %950 = vmatpush1.bf16.msra.mxu0 0
    %951 = vmatprep.subr.bf16.mxu0 0
    %952 = vmatpush1.bf16.msra.mxu0 0
    %953 = vmatprep.subr.bf16.mxu0 0
    %954 = vmatpush1.bf16.msra.mxu0 0
    %955 = vmatprep.subr.bf16.mxu0 0
    %956 = vmatpush1.bf16.msra.mxu0 0
    %957 = vmatprep.subr.bf16.mxu0 0
    %958 = vmatpush1.bf16.msra.mxu0 0
    %959 = vmatprep.subr.bf16.mxu0 0
    %960 = vmatpush1.bf16.msra.mxu0 0
    %961 = vmatprep.subr.bf16.mxu0 0
    %962 = vmatpush1.bf16.msra.mxu0 0
    %963 = vmatprep.subr.bf16.mxu0 0
    %964 = vmatpush1.bf16.msra.mxu0 0
    %965 = vmatprep.subr.bf16.mxu0 0
    %966 = vmatpush1.bf16.msra.mxu0 0
    %967 = vmatprep.subr.bf16.mxu0 0
    %968 = vmatpush1.bf16.msra.mxu0 0
    %969 = vmatprep.subr.bf16.mxu0 0
    %970 = vmatpush1.bf16.msra.mxu0 0
    %971 = vmatprep.subr.bf16.mxu0 0
    %972 = vmatpush1.bf16.msra.mxu0 0
    %973 = vmatprep.subr.bf16.mxu0 0
    %974 = vmatpush1.bf16.msra.mxu0 0
    %975 = vmatprep.mubr.bf16.mxu0 0
    %976 = vmatmul.mubr.bf16.gmra.mrb[0].mxu0 %v928
    %v977 = vpop.f32.mrb[0].mxu0
    %v978 = vadd.f32 0.0, %v977
    %v979 = vpop.f32.mrb[0].mxu0
    %v980 = vpop.f32.mrb[0].mxu0
    %v981 = vadd.f32 0.0, %v980
    %v982 = vpop.f32.mrb[0].mxu0
    %983 = vmatprep.mubr.bf16.mxu0 0
    %984 = vmatmul.mubr.bf16.gmra.mrb[0].mxu0 %v931
    %v985 = vpop.f32.mrb[0].mxu0
    %v986 = vadd.f32 0.0, %v985
    %v987 = vpop.f32.mrb[0].mxu0
    %v988 = vpop.f32.mrb[0].mxu0
    %v989 = vadd.f32 0.0, %v988
    %v990 = vpop.f32.mrb[0].mxu0
    %991 = vmatprep.mubr.bf16.mxu0 0
    %992 = vmatmul.mubr.bf16.gmra.mrb[0].mxu0 %v934
    %v993 = vpop.f32.mrb[0].mxu0
    %v994 = vadd.f32 0.0, %v993
    %v995 = vpop.f32.mrb[0].mxu0
    %v996 = vpop.f32.mrb[0].mxu0
    %v997 = vadd.f32 0.0, %v996
    %v998 = vpop.f32.mrb[0].mxu0
    %999 = vmatprep.mubr.bf16.mxu0 0
    %1000 = vmatmul.mubr.bf16.gmra.mrb[0].mxu0 %v937
    %v1001 = vpop.f32.mrb[0].mxu0
    %v1002 = vadd.f32 0.0, %v1001
    %v1003 = vpop.f32.mrb[0].mxu0
    %v1004 = vpop.f32.mrb[0].mxu0
    %v1005 = vadd.f32 0.0, %v1004
    %v1006 = vpop.f32.mrb[0].mxu0
    %1007 = vdwg.mxu0
    %1009 = vrot.lane.b32.xlu0 %v578, 96
    %v1010 = vpop.permute.xlu0 %1009
    %v1012 = vsel %vm739, %v920, 0
    %v1015 = vsel %vm739, %v921, 0
    %v1018 = vsel %vm739, %v922, 0
    %v1021 = vsel %vm739, %v923, 0
    %v1024 = vsel %vm939, %v1010, 0
    %1026 = vmatprep.subr.bf16.mxu0 0
    %1027 = vmatpush1.bf16.msra.mxu0 %v1024
    %1028 = vmatprep.subr.bf16.mxu0 0
    %1029 = vmatpush1.bf16.msra.mxu0 0
    %1030 = vmatprep.subr.bf16.mxu0 0
    %1031 = vmatpush1.bf16.msra.mxu0 0
    %1032 = vmatprep.subr.bf16.mxu0 0
    %1033 = vmatpush1.bf16.msra.mxu0 0
    %1034 = vmatprep.subr.bf16.mxu0 0
    %1035 = vmatpush1.bf16.msra.mxu0 0
    %1036 = vmatprep.subr.bf16.mxu0 0
    %1037 = vmatpush1.bf16.msra.mxu0 0
    %1038 = vmatprep.subr.bf16.mxu0 0
    %1039 = vmatpush1.bf16.msra.mxu0 0
    %1040 = vmatprep.subr.bf16.mxu0 0
    %1041 = vmatpush1.bf16.msra.mxu0 0
    %1042 = vmatprep.subr.bf16.mxu0 0
    %1043 = vmatpush1.bf16.msra.mxu0 0
    %1044 = vmatprep.subr.bf16.mxu0 0
    %1045 = vmatpush1.bf16.msra.mxu0 0
    %1046 = vmatprep.subr.bf16.mxu0 0
    %1047 = vmatpush1.bf16.msra.mxu0 0
    %1048 = vmatprep.subr.bf16.mxu0 0
    %1049 = vmatpush1.bf16.msra.mxu0 0
    %1050 = vmatprep.subr.bf16.mxu0 0
    %1051 = vmatpush1.bf16.msra.mxu0 0
    %1052 = vmatprep.subr.bf16.mxu0 0
    %1053 = vmatpush1.bf16.msra.mxu0 0
    %1054 = vmatprep.subr.bf16.mxu0 0
    %1055 = vmatpush1.bf16.msra.mxu0 0
    %1056 = vmatprep.subr.bf16.mxu0 0
    %1057 = vmatpush1.bf16.msra.mxu0 0
    %1058 = vmatprep.mubr.bf16.mxu0 0
    %1059 = vmatmul.mubr.bf16.gmra.mrb[0].mxu0 %v1012
    %v1060 = vpop.f32.mrb[0].mxu0
    %v1061 = vadd.f32 0.0, %v1060
    %v1062 = vpop.f32.mrb[0].mxu0
    %v1063 = vpop.f32.mrb[0].mxu0
    %v1064 = vadd.f32 0.0, %v1063
    %v1065 = vpop.f32.mrb[0].mxu0
    %1066 = vmatprep.mubr.bf16.mxu0 0
    %1067 = vmatmul.mubr.bf16.gmra.mrb[0].mxu0 %v1015
    %v1068 = vpop.f32.mrb[0].mxu0
    %v1069 = vadd.f32 0.0, %v1068
    %v1070 = vpop.f32.mrb[0].mxu0
    %v1071 = vpop.f32.mrb[0].mxu0
    %v1072 = vadd.f32 0.0, %v1071
    %v1073 = vpop.f32.mrb[0].mxu0
    %1074 = vmatprep.mubr.bf16.mxu0 0
    %1075 = vmatmul.mubr.bf16.gmra.mrb[0].mxu0 %v1018
    %v1076 = vpop.f32.mrb[0].mxu0
    %v1077 = vadd.f32 0.0, %v1076
    %v1078 = vpop.f32.mrb[0].mxu0
    %v1079 = vpop.f32.mrb[0].mxu0
    %v1080 = vadd.f32 0.0, %v1079
    %v1081 = vpop.f32.mrb[0].mxu0
    %1082 = vmatprep.mubr.bf16.mxu0 0
    %1083 = vmatmul.mubr.bf16.gmra.mrb[0].mxu0 %v1021
    %v1084 = vpop.f32.mrb[0].mxu0
    %v1085 = vadd.f32 0.0, %v1084
    %v1086 = vpop.f32.mrb[0].mxu0
    %v1087 = vpop.f32.mrb[0].mxu0
    %v1088 = vadd.f32 0.0, %v1087
    %v1089 = vpop.f32.mrb[0].mxu0
    %1090 = vdwg.mxu0
    %v1091 = vpack.c.bf16 %v981, %v978
    %v1092 = vpack.c.bf16 %v989, %v986
    %v1093 = vpack.c.bf16 %v997, %v994
    %v1094 = vpack.c.bf16 %v1005, %v1002
    %v1095 = vpack.c.bf16 %v1064, %v1061
    %v1096 = vpack.c.bf16 %v1072, %v1069
    %v1097 = vpack.c.bf16 %v1080, %v1077
    %v1098 = vpack.c.bf16 %v1088, %v1085
    %v1099 = vld [vmem:[%s6] sm:$0xf]
    %v1100 = vld [vmem:[%s6 + $0x4] sm:$0xf]
    %1105 = vrot.lane.b32.xlu0 %v569, 112
    %v1106 = vpop.permute.xlu0 %1105
    %1107 = vrot.lane.b32.xlu0 %v570, 112
    %v1108 = vpop.permute.xlu0 %1107
    %1109 = vrot.lane.b32.xlu0 %v571, 112
    %v1110 = vpop.permute.xlu0 %1109
    %1111 = vrot.lane.b32.xlu0 %v572, 112
    %v1112 = vpop.permute.xlu0 %1111
    %1113 = vrot.lane.b32.xlu0 %v577, 112
    %v1114 = vpop.permute.xlu0 %1113
    %v1116 = vsel %vm524, %v1106, 0
    %v1119 = vsel %vm524, %v1108, 0
    %v1122 = vsel %vm524, %v1110, 0
    %v1125 = vsel %vm524, %v1112, 0
    %v1128 = vsel %vm524, %v1114, 0
    %1130 = vmatprep.subr.bf16.mxu0 0
    %1131 = vmatpush1.bf16.xpose.msra.mxu0 %v1128
    %1132 = vmatprep.subr.bf16.mxu0 0
    %1133 = vmatpush1.bf16.xpose.msra.mxu0 0
    %1134 = vmatprep.subr.bf16.mxu0 0
    %1135 = vmatpush1.bf16.xpose.msra.mxu0 0
    %1136 = vmatprep.subr.bf16.mxu0 0
    %1137 = vmatpush1.bf16.xpose.msra.mxu0 0
    %1138 = vmatprep.subr.bf16.mxu0 0
    %1139 = vmatpush1.bf16.xpose.msra.mxu0 0
    %1140 = vmatprep.subr.bf16.mxu0 0
    %1141 = vmatpush1.bf16.xpose.msra.mxu0 0
    %1142 = vmatprep.subr.bf16.mxu0 0
    %1143 = vmatpush1.bf16.xpose.msra.mxu0 0
    %1144 = vmatprep.subr.bf16.mxu0 0
    %1145 = vmatpush1.bf16.xpose.msra.mxu0 0
    %1146 = vmatprep.subr.bf16.mxu0 0
    %1147 = vmatpush1.bf16.xpose.msra.mxu0 0
    %1148 = vmatprep.subr.bf16.mxu0 0
    %1149 = vmatpush1.bf16.xpose.msra.mxu0 0
    %1150 = vmatprep.subr.bf16.mxu0 0
    %1151 = vmatpush1.bf16.xpose.msra.mxu0 0
    %1152 = vmatprep.subr.bf16.mxu0 0
    %1153 = vmatpush1.bf16.xpose.msra.mxu0 0
    %1154 = vmatprep.subr.bf16.mxu0 0
    %1155 = vmatpush1.bf16.xpose.msra.mxu0 0
    %1156 = vmatprep.subr.bf16.mxu0 0
    %1157 = vmatpush1.bf16.xpose.msra.mxu0 0
    %1158 = vmatprep.subr.bf16.mxu0 0
    %1159 = vmatpush1.bf16.xpose.msra.mxu0 0
    %1160 = vmatprep.subr.bf16.mxu0 0
    %1161 = vmatpush1.bf16.xpose.msra.mxu0 0
    %1162 = vmatprep.mubr.bf16.mxu0 0
    %1163 = vmatmul.mubr.bf16.gmra.mrb[0].mxu0 %v1116
    %v1164 = vpop.f32.mrb[0].mxu0
    %v1165 = vadd.f32 0.0, %v1164
    %v1166 = vpop.f32.mrb[0].mxu0
    %v1167 = vpop.f32.mrb[0].mxu0
    %v1168 = vadd.f32 0.0, %v1167
    %v1169 = vpop.f32.mrb[0].mxu0
    %1170 = vmatprep.mubr.bf16.mxu0 0
    %1171 = vmatmul.mubr.bf16.gmra.mrb[0].mxu0 %v1119
    %v1172 = vpop.f32.mrb[0].mxu0
    %v1173 = vadd.f32 0.0, %v1172
    %v1174 = vpop.f32.mrb[0].mxu0
    %v1175 = vpop.f32.mrb[0].mxu0
    %v1176 = vadd.f32 0.0, %v1175
    %v1177 = vpop.f32.mrb[0].mxu0
    %1178 = vmatprep.mubr.bf16.mxu0 0
    %1179 = vmatmul.mubr.bf16.gmra.mrb[0].mxu0 %v1122
    %v1180 = vpop.f32.mrb[0].mxu0
    %v1181 = vadd.f32 0.0, %v1180
    %v1182 = vpop.f32.mrb[0].mxu0
    %v1183 = vpop.f32.mrb[0].mxu0
    %v1184 = vadd.f32 0.0, %v1183
    %v1185 = vpop.f32.mrb[0].mxu0
    %1186 = vmatprep.mubr.bf16.mxu0 0
    %1187 = vmatmul.mubr.bf16.gmra.mrb[0].mxu0 %v1125
    %v1188 = vpop.f32.mrb[0].mxu0
    %v1189 = vadd.f32 0.0, %v1188
    %v1190 = vpop.f32.mrb[0].mxu0
    %v1191 = vpop.f32.mrb[0].mxu0
    %v1192 = vadd.f32 0.0, %v1191
    %v1193 = vpop.f32.mrb[0].mxu0
    %1194 = vdwg.mxu0
    %1199 = vrot.lane.b32.xlu0 %v573, 112
    %v1200 = vpop.permute.xlu0 %1199
    %1201 = vrot.lane.b32.xlu0 %v574, 112
    %v1202 = vpop.permute.xlu0 %1201
    %1203 = vrot.lane.b32.xlu0 %v575, 112
    %v1204 = vpop.permute.xlu0 %1203
    %1205 = vrot.lane.b32.xlu0 %v576, 112
    %v1206 = vpop.permute.xlu0 %1205
    %1207 = vrot.lane.b32.xlu0 %v578, 112
    %v1208 = vpop.permute.xlu0 %1207
    %v1210 = vsel %vm524, %v1200, 0
    %v1213 = vsel %vm524, %v1202, 0
    %v1216 = vsel %vm524, %v1204, 0
    %v1219 = vsel %vm524, %v1206, 0
    %v1222 = vsel %vm524, %v1208, 0
    %1224 = vmatprep.subr.bf16.mxu0 0
    %1225 = vmatpush1.bf16.xpose.msra.mxu0 %v1222
    %1226 = vmatprep.subr.bf16.mxu0 0
    %1227 = vmatpush1.bf16.xpose.msra.mxu0 0
    %1228 = vmatprep.subr.bf16.mxu0 0
    %1229 = vmatpush1.bf16.xpose.msra.mxu0 0
    %1230 = vmatprep.subr.bf16.mxu0 0
    %1231 = vmatpush1.bf16.xpose.msra.mxu0 0
    %1232 = vmatprep.subr.bf16.mxu0 0
    %1233 = vmatpush1.bf16.xpose.msra.mxu0 0
    %1234 = vmatprep.subr.bf16.mxu0 0
    %1235 = vmatpush1.bf16.xpose.msra.mxu0 0
    %1236 = vmatprep.subr.bf16.mxu0 0
    %1237 = vmatpush1.bf16.xpose.msra.mxu0 0
    %1238 = vmatprep.subr.bf16.mxu0 0
    %1239 = vmatpush1.bf16.xpose.msra.mxu0 0
    %1240 = vmatprep.subr.bf16.mxu0 0
    %1241 = vmatpush1.bf16.xpose.msra.mxu0 0
    %1242 = vmatprep.subr.bf16.mxu0 0
    %1243 = vmatpush1.bf16.xpose.msra.mxu0 0
    %1244 = vmatprep.subr.bf16.mxu0 0
    %1245 = vmatpush1.bf16.xpose.msra.mxu0 0
    %1246 = vmatprep.subr.bf16.mxu0 0
    %1247 = vmatpush1.bf16.xpose.msra.mxu0 0
    %1248 = vmatprep.subr.bf16.mxu0 0
    %1249 = vmatpush1.bf16.xpose.msra.mxu0 0
    %1250 = vmatprep.subr.bf16.mxu0 0
    %1251 = vmatpush1.bf16.xpose.msra.mxu0 0
    %1252 = vmatprep.subr.bf16.mxu0 0
    %1253 = vmatpush1.bf16.xpose.msra.mxu0 0
    %1254 = vmatprep.subr.bf16.mxu0 0
    %1255 = vmatpush1.bf16.xpose.msra.mxu0 0
    %1256 = vmatprep.mubr.bf16.mxu0 0
    %1257 = vmatmul.mubr.bf16.gmra.mrb[0].mxu0 %v1210
    %v1258 = vpop.f32.mrb[0].mxu0
    %v1259 = vadd.f32 0.0, %v1258
    %v1260 = vpop.f32.mrb[0].mxu0
    %v1261 = vpop.f32.mrb[0].mxu0
    %v1262 = vadd.f32 0.0, %v1261
    %v1263 = vpop.f32.mrb[0].mxu0
    %1264 = vmatprep.mubr.bf16.mxu0 0
    %1265 = vmatmul.mubr.bf16.gmra.mrb[0].mxu0 %v1213
    %v1266 = vpop.f32.mrb[0].mxu0
    %v1267 = vadd.f32 0.0, %v1266
    %v1268 = vpop.f32.mrb[0].mxu0
    %v1269 = vpop.f32.mrb[0].mxu0
    %v1270 = vadd.f32 0.0, %v1269
    %v1271 = vpop.f32.mrb[0].mxu0
    %1272 = vmatprep.mubr.bf16.mxu0 0
    %1273 = vmatmul.mubr.bf16.gmra.mrb[0].mxu0 %v1216
    %v1274 = vpop.f32.mrb[0].mxu0
    %v1275 = vadd.f32 0.0, %v1274
    %v1276 = vpop.f32.mrb[0].mxu0
    %v1277 = vpop.f32.mrb[0].mxu0
    %v1278 = vadd.f32 0.0, %v1277
    %v1279 = vpop.f32.mrb[0].mxu0
    %1280 = vmatprep.mubr.bf16.mxu0 0
    %1281 = vmatmul.mubr.bf16.gmra.mrb[0].mxu0 %v1219
    %v1282 = vpop.f32.mrb[0].mxu0
    %v1283 = vadd.f32 0.0, %v1282
    %v1284 = vpop.f32.mrb[0].mxu0
    %v1285 = vpop.f32.mrb[0].mxu0
    %v1286 = vadd.f32 0.0, %v1285
    %v1287 = vpop.f32.mrb[0].mxu0
    %1288 = vdwg.mxu0
    %v1289 = vsel %vm739, %v1165, -inf
    %1290 = vmax.xlane.f32.xlu0 %v1289
    %v1291 = vpop.xlane.xlu0 %1290
    %v1292 = vsel %vm739, %v1168, -inf
    %1293 = vmax.xlane.f32.xlu0 %v1292
    %v1294 = vpop.xlane.xlu0 %1293
    %v1295 = vsel %vm739, %v1173, -inf
    %1296 = vmax.xlane.f32.xlu0 %v1295
    %v1297 = vpop.xlane.xlu0 %1296
    %v1298 = vsel %vm739, %v1176, -inf
    %1299 = vmax.xlane.f32.xlu0 %v1298
    %v1300 = vpop.xlane.xlu0 %1299
    %v1301 = vsel %vm739, %v1181, -inf
    %1302 = vmax.xlane.f32.xlu0 %v1301
    %v1303 = vpop.xlane.xlu0 %1302
    %v1304 = vsel %vm739, %v1184, -inf
    %1305 = vmax.xlane.f32.xlu0 %v1304
    %v1306 = vpop.xlane.xlu0 %1305
    %v1307 = vsel %vm739, %v1189, -inf
    %1308 = vmax.xlane.f32.xlu0 %v1307
    %v1309 = vpop.xlane.xlu0 %1308
    %v1310 = vsel %vm739, %v1192, -inf
    %1311 = vmax.xlane.f32.xlu0 %v1310
    %v1312 = vpop.xlane.xlu0 %1311
    %v1313 = vsel %vm739, %v1259, -inf
    %1314 = vmax.xlane.f32.xlu0 %v1313
    %v1315 = vpop.xlane.xlu0 %1314
    %v1316 = vsel %vm739, %v1262, -inf
    %1317 = vmax.xlane.f32.xlu0 %v1316
    %v1318 = vpop.xlane.xlu0 %1317
    %v1319 = vsel %vm739, %v1267, -inf
    %1320 = vmax.xlane.f32.xlu0 %v1319
    %v1321 = vpop.xlane.xlu0 %1320
    %v1322 = vsel %vm739, %v1270, -inf
    %1323 = vmax.xlane.f32.xlu0 %v1322
    %v1324 = vpop.xlane.xlu0 %1323
    %v1325 = vsel %vm739, %v1275, -inf
    %1326 = vmax.xlane.f32.xlu0 %v1325
    %v1327 = vpop.xlane.xlu0 %1326
    %v1328 = vsel %vm739, %v1278, -inf
    %1329 = vmax.xlane.f32.xlu0 %v1328
    %v1330 = vpop.xlane.xlu0 %1329
    %v1331 = vsel %vm739, %v1283, -inf
    %1332 = vmax.xlane.f32.xlu0 %v1331
    %v1333 = vpop.xlane.xlu0 %1332
    %v1334 = vsel %vm739, %v1286, -inf
    %1335 = vmax.xlane.f32.xlu0 %v1334
    %v1336 = vpop.xlane.xlu0 %1335
    %v1337 = vsub.f32 %v1165, %v1291
    %v1338 = vsub.f32 %v1168, %v1294
    %v1339 = vsub.f32 %v1173, %v1297
    %v1340 = vsub.f32 %v1176, %v1300
    %v1341 = vsub.f32 %v1181, %v1303
    %v1342 = vsub.f32 %v1184, %v1306
    %v1343 = vsub.f32 %v1189, %v1309
    %v1344 = vsub.f32 %v1192, %v1312
    %v1345 = vsub.f32 %v1259, %v1315
    %v1346 = vsub.f32 %v1262, %v1318
    %v1347 = vsub.f32 %v1267, %v1321
    %v1348 = vsub.f32 %v1270, %v1324
    %v1349 = vsub.f32 %v1275, %v1327
    %v1350 = vsub.f32 %v1278, %v1330
    %v1351 = vsub.f32 %v1283, %v1333
    %v1352 = vsub.f32 %v1286, %v1336
    %v1353 = vmul.f32 %v1337, 1.442695
    %v1354 = vpow.pop %v1353
    %v1355 = vmul.f32 %v1338, 1.442695
    %v1356 = vpow.pop %v1355
    %v1357 = vmul.f32 %v1339, 1.442695
    %v1358 = vpow.pop %v1357
    %v1359 = vmul.f32 %v1340, 1.442695
    %v1360 = vpow.pop %v1359
    %v1361 = vmul.f32 %v1341, 1.442695
    %v1362 = vpow.pop %v1361
    %v1363 = vmul.f32 %v1342, 1.442695
    %v1364 = vpow.pop %v1363
    %v1365 = vmul.f32 %v1343, 1.442695
    %v1366 = vpow.pop %v1365
    %v1367 = vmul.f32 %v1344, 1.442695
    %v1368 = vpow.pop %v1367
    %v1369 = vmul.f32 %v1345, 1.442695
    %v1370 = vpow.pop %v1369
    %v1371 = vmul.f32 %v1346, 1.442695
    %v1372 = vpow.pop %v1371
    %v1373 = vmul.f32 %v1347, 1.442695
    %v1374 = vpow.pop %v1373
    %v1375 = vmul.f32 %v1348, 1.442695
    %v1376 = vpow.pop %v1375
    %v1377 = vmul.f32 %v1349, 1.442695
    %v1378 = vpow.pop %v1377
    %v1379 = vmul.f32 %v1350, 1.442695
    %v1380 = vpow.pop %v1379
    %v1381 = vmul.f32 %v1351, 1.442695
    %v1382 = vpow.pop %v1381
    %v1383 = vmul.f32 %v1352, 1.442695
    %v1384 = vpow.pop %v1383
    %v1385 = vsel %vm739, %v1354, 0.0
    %1386 = vadd.xlane.f32.xlu0 %v1385
    %v1387 = vpop.xlane.xlu0 %1386
    %v1388 = vsel %vm739, %v1356, 0.0
    %1389 = vadd.xlane.f32.xlu0 %v1388
    %v1390 = vpop.xlane.xlu0 %1389
    %v1391 = vsel %vm739, %v1358, 0.0
    %1392 = vadd.xlane.f32.xlu0 %v1391
    %v1393 = vpop.xlane.xlu0 %1392
    %v1394 = vsel %vm739, %v1360, 0.0
    %1395 = vadd.xlane.f32.xlu0 %v1394
    %v1396 = vpop.xlane.xlu0 %1395
    %v1397 = vsel %vm739, %v1362, 0.0
    %1398 = vadd.xlane.f32.xlu0 %v1397
    %v1399 = vpop.xlane.xlu0 %1398
    %v1400 = vsel %vm739, %v1364, 0.0
    %1401 = vadd.xlane.f32.xlu0 %v1400
    %v1402 = vpop.xlane.xlu0 %1401
    %v1403 = vsel %vm739, %v1366, 0.0
    %1404 = vadd.xlane.f32.xlu0 %v1403
    %v1405 = vpop.xlane.xlu0 %1404
    %v1406 = vsel %vm739, %v1368, 0.0
    %1407 = vadd.xlane.f32.xlu0 %v1406
    %v1408 = vpop.xlane.xlu0 %1407
    %v1409 = vsel %vm739, %v1370, 0.0
    %1410 = vadd.xlane.f32.xlu0 %v1409
    %v1411 = vpop.xlane.xlu0 %1410
    %v1412 = vsel %vm739, %v1372, 0.0
    %1413 = vadd.xlane.f32.xlu0 %v1412
    %v1414 = vpop.xlane.xlu0 %1413
    %v1415 = vsel %vm739, %v1374, 0.0
    %1416 = vadd.xlane.f32.xlu0 %v1415
    %v1417 = vpop.xlane.xlu0 %1416
    %v1418 = vsel %vm739, %v1376, 0.0
    %1419 = vadd.xlane.f32.xlu0 %v1418
    %v1420 = vpop.xlane.xlu0 %1419
    %v1421 = vsel %vm739, %v1378, 0.0
    %1422 = vadd.xlane.f32.xlu0 %v1421
    %v1423 = vpop.xlane.xlu0 %1422
    %v1424 = vsel %vm739, %v1380, 0.0
    %1425 = vadd.xlane.f32.xlu0 %v1424
    %v1426 = vpop.xlane.xlu0 %1425
    %v1427 = vsel %vm739, %v1382, 0.0
    %1428 = vadd.xlane.f32.xlu0 %v1427
    %v1429 = vpop.xlane.xlu0 %1428
    %v1430 = vsel %vm739, %v1384, 0.0
    %1431 = vadd.xlane.f32.xlu0 %v1430
    %v1432 = vpop.xlane.xlu0 %1431
    %v1433 = vrcp.pop %v1387
    %v1434 = vrcp.pop %v1390
    %v1435 = vrcp.pop %v1393
    %v1436 = vrcp.pop %v1396
    %v1437 = vrcp.pop %v1399
    %v1438 = vrcp.pop %v1402
    %v1439 = vrcp.pop %v1405
    %v1440 = vrcp.pop %v1408
    %v1441 = vrcp.pop %v1411
    %v1442 = vrcp.pop %v1414
    %v1443 = vrcp.pop %v1417
    %v1444 = vrcp.pop %v1420
    %v1445 = vrcp.pop %v1423
    %v1446 = vrcp.pop %v1426
    %v1447 = vrcp.pop %v1429
    %v1448 = vrcp.pop %v1432
    %v1449 = vmul.f32 %v1354, %v1433
    %v1450 = vmul.f32 %v1356, %v1434
    %v1451 = vmul.f32 %v1358, %v1435
    %v1452 = vmul.f32 %v1360, %v1436
    %v1453 = vmul.f32 %v1362, %v1437
    %v1454 = vmul.f32 %v1364, %v1438
    %v1455 = vmul.f32 %v1366, %v1439
    %v1456 = vmul.f32 %v1368, %v1440
    %v1457 = vmul.f32 %v1370, %v1441
    %v1458 = vmul.f32 %v1372, %v1442
    %v1459 = vmul.f32 %v1374, %v1443
    %v1460 = vmul.f32 %v1376, %v1444
    %v1461 = vmul.f32 %v1378, %v1445
    %v1462 = vmul.f32 %v1380, %v1446
    %v1463 = vmul.f32 %v1382, %v1447
    %v1464 = vmul.f32 %v1384, %v1448
    %v1465 = vpack.c.bf16 %v1450, %v1449
    %v1466 = vpack.c.bf16 %v1452, %v1451
    %v1467 = vpack.c.bf16 %v1454, %v1453
    %v1468 = vpack.c.bf16 %v1456, %v1455
    %v1469 = vpack.c.bf16 %v1458, %v1457
    %v1470 = vpack.c.bf16 %v1460, %v1459
    %v1471 = vpack.c.bf16 %v1462, %v1461
    %v1472 = vpack.c.bf16 %v1464, %v1463
    %1473 = vrot.lane.b32.xlu0 %v577, 80
    %v1474 = vpop.permute.xlu0 %1473
    %v1476 = vsel %vm739, %v1465, 0
    %v1479 = vsel %vm739, %v1466, 0
    %v1482 = vsel %vm739, %v1467, 0
    %v1485 = vsel %vm739, %v1468, 0
    %v1488 = vsel %vm939, %v1474, 0
    %1490 = vmatprep.subr.bf16.mxu0 0
    %1491 = vmatpush1.bf16.msra.mxu0 %v1488
    %1492 = vmatprep.subr.bf16.mxu0 0
    %1493 = vmatpush1.bf16.msra.mxu0 0
    %1494 = vmatprep.subr.bf16.mxu0 0
    %1495 = vmatpush1.bf16.msra.mxu0 0
    %1496 = vmatprep.subr.bf16.mxu0 0
    %1497 = vmatpush1.bf16.msra.mxu0 0
    %1498 = vmatprep.subr.bf16.mxu0 0
    %1499 = vmatpush1.bf16.msra.mxu0 0
    %1500 = vmatprep.subr.bf16.mxu0 0
    %1501 = vmatpush1.bf16.msra.mxu0 0
    %1502 = vmatprep.subr.bf16.mxu0 0
    %1503 = vmatpush1.bf16.msra.mxu0 0
    %1504 = vmatprep.subr.bf16.mxu0 0
    %1505 = vmatpush1.bf16.msra.mxu0 0
    %1506 = vmatprep.subr.bf16.mxu0 0
    %1507 = vmatpush1.bf16.msra.mxu0 0
    %1508 = vmatprep.subr.bf16.mxu0 0
    %1509 = vmatpush1.bf16.msra.mxu0 0
    %1510 = vmatprep.subr.bf16.mxu0 0
    %1511 = vmatpush1.bf16.msra.mxu0 0
    %1512 = vmatprep.subr.bf16.mxu0 0
    %1513 = vmatpush1.bf16.msra.mxu0 0
    %1514 = vmatprep.subr.bf16.mxu0 0
    %1515 = vmatpush1.bf16.msra.mxu0 0
    %1516 = vmatprep.subr.bf16.mxu0 0
    %1517 = vmatpush1.bf16.msra.mxu0 0
    %1518 = vmatprep.subr.bf16.mxu0 0
    %1519 = vmatpush1.bf16.msra.mxu0 0
    %1520 = vmatprep.subr.bf16.mxu0 0
    %1521 = vmatpush1.bf16.msra.mxu0 0
    %1522 = vmatprep.mubr.bf16.mxu0 0
    %1523 = vmatmul.mubr.bf16.gmra.mrb[0].mxu0 %v1476
    %v1524 = vpop.f32.mrb[0].mxu0
    %v1525 = vadd.f32 0.0, %v1524
    %v1526 = vpop.f32.mrb[0].mxu0
    %v1527 = vpop.f32.mrb[0].mxu0
    %v1528 = vadd.f32 0.0, %v1527
    %v1529 = vpop.f32.mrb[0].mxu0
    %1530 = vmatprep.mubr.bf16.mxu0 0
    %1531 = vmatmul.mubr.bf16.gmra.mrb[0].mxu0 %v1479
    %v1532 = vpop.f32.mrb[0].mxu0
    %v1533 = vadd.f32 0.0, %v1532
    %v1534 = vpop.f32.mrb[0].mxu0
    %v1535 = vpop.f32.mrb[0].mxu0
    %v1536 = vadd.f32 0.0, %v1535
    %v1537 = vpop.f32.mrb[0].mxu0
    %1538 = vmatprep.mubr.bf16.mxu0 0
    %1539 = vmatmul.mubr.bf16.gmra.mrb[0].mxu0 %v1482
    %v1540 = vpop.f32.mrb[0].mxu0
    %v1541 = vadd.f32 0.0, %v1540
    %v1542 = vpop.f32.mrb[0].mxu0
    %v1543 = vpop.f32.mrb[0].mxu0
    %v1544 = vadd.f32 0.0, %v1543
    %v1545 = vpop.f32.mrb[0].mxu0
    %1546 = vmatprep.mubr.bf16.mxu0 0
    %1547 = vmatmul.mubr.bf16.gmra.mrb[0].mxu0 %v1485
    %v1548 = vpop.f32.mrb[0].mxu0
    %v1549 = vadd.f32 0.0, %v1548
    %v1550 = vpop.f32.mrb[0].mxu0
    %v1551 = vpop.f32.mrb[0].mxu0
    %v1552 = vadd.f32 0.0, %v1551
    %v1553 = vpop.f32.mrb[0].mxu0
    %1554 = vdwg.mxu0
    %1555 = vrot.lane.b32.xlu0 %v578, 80
    %v1556 = vpop.permute.xlu0 %1555
    %v1558 = vsel %vm739, %v1469, 0
    %v1561 = vsel %vm739, %v1470, 0
    %v1564 = vsel %vm739, %v1471, 0
    %v1567 = vsel %vm739, %v1472, 0
    %v1570 = vsel %vm939, %v1556, 0
    %1572 = vmatprep.subr.bf16.mxu0 0
    %1573 = vmatpush1.bf16.msra.mxu0 %v1570
    %1574 = vmatprep.subr.bf16.mxu0 0
    %1575 = vmatpush1.bf16.msra.mxu0 0
    %1576 = vmatprep.subr.bf16.mxu0 0
    %1577 = vmatpush1.bf16.msra.mxu0 0
    %1578 = vmatprep.subr.bf16.mxu0 0
    %1579 = vmatpush1.bf16.msra.mxu0 0
    %1580 = vmatprep.subr.bf16.mxu0 0
    %1581 = vmatpush1.bf16.msra.mxu0 0
    %1582 = vmatprep.subr.bf16.mxu0 0
    %1583 = vmatpush1.bf16.msra.mxu0 0
    %1584 = vmatprep.subr.bf16.mxu0 0
    %1585 = vmatpush1.bf16.msra.mxu0 0
    %1586 = vmatprep.subr.bf16.mxu0 0
    %1587 = vmatpush1.bf16.msra.mxu0 0
    %1588 = vmatprep.subr.bf16.mxu0 0
    %1589 = vmatpush1.bf16.msra.mxu0 0
    %1590 = vmatprep.subr.bf16.mxu0 0
    %1591 = vmatpush1.bf16.msra.mxu0 0
    %1592 = vmatprep.subr.bf16.mxu0 0
    %1593 = vmatpush1.bf16.msra.mxu0 0
    %1594 = vmatprep.subr.bf16.mxu0 0
    %1595 = vmatpush1.bf16.msra.mxu0 0
    %1596 = vmatprep.subr.bf16.mxu0 0
    %1597 = vmatpush1.bf16.msra.mxu0 0
    %1598 = vmatprep.subr.bf16.mxu0 0
    %1599 = vmatpush1.bf16.msra.mxu0 0
    %1600 = vmatprep.subr.bf16.mxu0 0
    %1601 = vmatpush1.bf16.msra.mxu0 0
    %1602 = vmatprep.subr.bf16.mxu0 0
    %1603 = vmatpush1.bf16.msra.mxu0 0
    %1604 = vmatprep.mubr.bf16.mxu0 0
    %1605 = vmatmul.mubr.bf16.gmra.mrb[0].mxu0 %v1558
    %v1606 = vpop.f32.mrb[0].mxu0
    %v1607 = vadd.f32 0.0, %v1606
    %v1608 = vpop.f32.mrb[0].mxu0
    %v1609 = vpop.f32.mrb[0].mxu0
    %v1610 = vadd.f32 0.0, %v1609
    %v1611 = vpop.f32.mrb[0].mxu0
    %1612 = vmatprep.mubr.bf16.mxu0 0
    %1613 = vmatmul.mubr.bf16.gmra.mrb[0].mxu0 %v1561
    %v1614 = vpop.f32.mrb[0].mxu0
    %v1615 = vadd.f32 0.0, %v1614
    %v1616 = vpop.f32.mrb[0].mxu0
    %v1617 = vpop.f32.mrb[0].mxu0
    %v1618 = vadd.f32 0.0, %v1617
    %v1619 = vpop.f32.mrb[0].mxu0
    %1620 = vmatprep.mubr.bf16.mxu0 0
    %1621 = vmatmul.mubr.bf16.gmra.mrb[0].mxu0 %v1564
    %v1622 = vpop.f32.mrb[0].mxu0
    %v1623 = vadd.f32 0.0, %v1622
    %v1624 = vpop.f32.mrb[0].mxu0
    %v1625 = vpop.f32.mrb[0].mxu0
    %v1626 = vadd.f32 0.0, %v1625
    %v1627 = vpop.f32.mrb[0].mxu0
    %1628 = vmatprep.mubr.bf16.mxu0 0
    %1629 = vmatmul.mubr.bf16.gmra.mrb[0].mxu0 %v1567
    %v1630 = vpop.f32.mrb[0].mxu0
    %v1631 = vadd.f32 0.0, %v1630
    %v1632 = vpop.f32.mrb[0].mxu0
    %v1633 = vpop.f32.mrb[0].mxu0
    %v1634 = vadd.f32 0.0, %v1633
    %v1635 = vpop.f32.mrb[0].mxu0
    %1636 = vdwg.mxu0
    %v1637 = vpack.c.bf16 %v1528, %v1525
    %v1638 = vpack.c.bf16 %v1536, %v1533
    %v1639 = vpack.c.bf16 %v1544, %v1541
    %v1640 = vpack.c.bf16 %v1552, %v1549
    %v1641 = vpack.c.bf16 %v1610, %v1607
    %v1642 = vpack.c.bf16 %v1618, %v1615
    %v1643 = vpack.c.bf16 %v1626, %v1623
    %v1644 = vpack.c.bf16 %v1634, %v1631
    %v1645 = vld [vmem:[%s6 + $0x8] sm:$0xf]
    %v1646 = vld [vmem:[%s6 + $0xc] sm:$0xf]
    %v1649 = vunpack.c.l.b16 %v1645
    %v1650 = vunpack.c.l.b16 %v1646
    %v1651 = vpack.c.b16 %v1650, %v1649
    %v1654 = vsel %vm524, %v1637, 0
    %v1657 = vsel %vm524, %v1638, 0
    %v1660 = vsel %vm524, %v1639, 0
    %v1663 = vsel %vm524, %v1640, 0
    %v1666 = vsel %vm524, %v1641, 0
    %v1669 = vsel %vm524, %v1642, 0
    %v1672 = vsel %vm524, %v1643, 0
    %v1675 = vsel %vm524, %v1644, 0
    %1677 = vmatprep.subr.bf16.mxu0 0
    %1678 = vmatpush1.bf16.msra.mxu0 %v1651
    %1679 = vmatprep.subr.bf16.mxu0 0
    %1680 = vmatpush1.bf16.msra.mxu0 0
    %1681 = vmatprep.subr.bf16.mxu0 0
    %1682 = vmatpush1.bf16.msra.mxu0 0
    %1683 = vmatprep.subr.bf16.mxu0 0
    %1684 = vmatpush1.bf16.msra.mxu0 0
    %1685 = vmatprep.subr.bf16.mxu0 0
    %1686 = vmatpush1.bf16.msra.mxu0 0
    %1687 = vmatprep.subr.bf16.mxu0 0
    %1688 = vmatpush1.bf16.msra.mxu0 0
    %1689 = vmatprep.subr.bf16.mxu0 0
    %1690 = vmatpush1.bf16.msra.mxu0 0
    %1691 = vmatprep.subr.bf16.mxu0 0
    %1692 = vmatpush1.bf16.msra.mxu0 0
    %1693 = vmatprep.subr.bf16.mxu0 0
    %1694 = vmatpush1.bf16.msra.mxu0 0
    %1695 = vmatprep.subr.bf16.mxu0 0
    %1696 = vmatpush1.bf16.msra.mxu0 0
    %1697 = vmatprep.subr.bf16.mxu0 0
    %1698 = vmatpush1.bf16.msra.mxu0 0
    %1699 = vmatprep.subr.bf16.mxu0 0
    %1700 = vmatpush1.bf16.msra.mxu0 0
    %1701 = vmatprep.subr.bf16.mxu0 0
    %1702 = vmatpush1.bf16.msra.mxu0 0
    %1703 = vmatprep.subr.bf16.mxu0 0
    %1704 = vmatpush1.bf16.msra.mxu0 0
    %1705 = vmatprep.subr.bf16.mxu0 0
    %1706 = vmatpush1.bf16.msra.mxu0 0
    %1707 = vmatprep.subr.bf16.mxu0 0
    %1708 = vmatpush1.bf16.msra.mxu0 0
    %1709 = vmatprep.mubr.bf16.mxu0 0
    %1710 = vmatmul.mubr.bf16.gmra.mrb[0].mxu0 %v1654
    %v1711 = vpop.f32.mrb[0].mxu0
    %v1712 = vadd.f32 0.0, %v1711
    %v1713 = vpop.f32.mrb[0].mxu0
    %v1714 = vpop.f32.mrb[0].mxu0
    %v1715 = vadd.f32 0.0, %v1714
    %v1716 = vpop.f32.mrb[0].mxu0
    %1717 = vmatprep.mubr.bf16.mxu0 0
    %1718 = vmatmul.mubr.bf16.gmra.mrb[0].mxu0 %v1657
    %v1719 = vpop.f32.mrb[0].mxu0
    %v1720 = vadd.f32 0.0, %v1719
    %v1721 = vpop.f32.mrb[0].mxu0
    %v1722 = vpop.f32.mrb[0].mxu0
    %v1723 = vadd.f32 0.0, %v1722
    %v1724 = vpop.f32.mrb[0].mxu0
    %1725 = vmatprep.mubr.bf16.mxu0 0
    %1726 = vmatmul.mubr.bf16.gmra.mrb[0].mxu0 %v1660
    %v1727 = vpop.f32.mrb[0].mxu0
    %v1728 = vadd.f32 0.0, %v1727
    %v1729 = vpop.f32.mrb[0].mxu0
    %v1730 = vpop.f32.mrb[0].mxu0
    %v1731 = vadd.f32 0.0, %v1730
    %v1732 = vpop.f32.mrb[0].mxu0
    %1733 = vmatprep.mubr.bf16.mxu0 0
    %1734 = vmatmul.mubr.bf16.gmra.mrb[0].mxu0 %v1663
    %v1735 = vpop.f32.mrb[0].mxu0
    %v1736 = vadd.f32 0.0, %v1735
    %v1737 = vpop.f32.mrb[0].mxu0
    %v1738 = vpop.f32.mrb[0].mxu0
    %v1739 = vadd.f32 0.0, %v1738
    %v1740 = vpop.f32.mrb[0].mxu0
    %1741 = vmatprep.mubr.bf16.mxu0 0
    %1742 = vmatmul.mubr.bf16.gmra.mrb[0].mxu0 %v1666
    %v1743 = vpop.f32.mrb[0].mxu0
    %v1744 = vadd.f32 0.0, %v1743
    %v1745 = vpop.f32.mrb[0].mxu0
    %v1746 = vpop.f32.mrb[0].mxu0
    %v1747 = vadd.f32 0.0, %v1746
    %v1748 = vpop.f32.mrb[0].mxu0
    %1749 = vmatprep.mubr.bf16.mxu0 0
    %1750 = vmatmul.mubr.bf16.gmra.mrb[0].mxu0 %v1669
    %v1751 = vpop.f32.mrb[0].mxu0
    %v1752 = vadd.f32 0.0, %v1751
    %v1753 = vpop.f32.mrb[0].mxu0
    %v1754 = vpop.f32.mrb[0].mxu0
    %v1755 = vadd.f32 0.0, %v1754
    %v1756 = vpop.f32.mrb[0].mxu0
    %1757 = vmatprep.mubr.bf16.mxu0 0
    %1758 = vmatmul.mubr.bf16.gmra.mrb[0].mxu0 %v1672
    %v1759 = vpop.f32.mrb[0].mxu0
    %v1760 = vadd.f32 0.0, %v1759
    %v1761 = vpop.f32.mrb[0].mxu0
    %v1762 = vpop.f32.mrb[0].mxu0
    %v1763 = vadd.f32 0.0, %v1762
    %v1764 = vpop.f32.mrb[0].mxu0
    %1765 = vmatprep.mubr.bf16.mxu0 0
    %1766 = vmatmul.mubr.bf16.gmra.mrb[0].mxu0 %v1675
    %v1767 = vpop.f32.mrb[0].mxu0
    %v1768 = vadd.f32 0.0, %v1767
    %v1769 = vpop.f32.mrb[0].mxu0
    %v1770 = vpop.f32.mrb[0].mxu0
    %v1771 = vadd.f32 0.0, %v1770
    %v1772 = vpop.f32.mrb[0].mxu0
    %1773 = vdwg.mxu0
    %v1776 = vunpack.c.l.b16 %v1099
    %v1777 = vunpack.c.l.b16 %v1100
    %v1778 = vpack.c.b16 %v1777, %v1776
    %v1781 = vsel %vm524, %v1091, 0
    %v1784 = vsel %vm524, %v1092, 0
    %v1787 = vsel %vm524, %v1093, 0
    %v1790 = vsel %vm524, %v1094, 0
    %v1793 = vsel %vm524, %v1095, 0
    %v1796 = vsel %vm524, %v1096, 0
    %v1799 = vsel %vm524, %v1097, 0
    %v1802 = vsel %vm524, %v1098, 0
    %1804 = vmatprep.subr.bf16.mxu0 0
    %1805 = vmatpush1.bf16.msra.mxu0 %v1778
    %1806 = vmatprep.subr.bf16.mxu0 0
    %1807 = vmatpush1.bf16.msra.mxu0 0
    %1808 = vmatprep.subr.bf16.mxu0 0
    %1809 = vmatpush1.bf16.msra.mxu0 0
    %1810 = vmatprep.subr.bf16.mxu0 0
    %1811 = vmatpush1.bf16.msra.mxu0 0
    %1812 = vmatprep.subr.bf16.mxu0 0
    %1813 = vmatpush1.bf16.msra.mxu0 0
    %1814 = vmatprep.subr.bf16.mxu0 0
    %1815 = vmatpush1.bf16.msra.mxu0 0
    %1816 = vmatprep.subr.bf16.mxu0 0
    %1817 = vmatpush1.bf16.msra.mxu0 0
    %1818 = vmatprep.subr.bf16.mxu0 0
    %1819 = vmatpush1.bf16.msra.mxu0 0
    %1820 = vmatprep.subr.bf16.mxu0 0
    %1821 = vmatpush1.bf16.msra.mxu0 0
    %1822 = vmatprep.subr.bf16.mxu0 0
    %1823 = vmatpush1.bf16.msra.mxu0 0
    %1824 = vmatprep.subr.bf16.mxu0 0
    %1825 = vmatpush1.bf16.msra.mxu0 0
    %1826 = vmatprep.subr.bf16.mxu0 0
    %1827 = vmatpush1.bf16.msra.mxu0 0
    %1828 = vmatprep.subr.bf16.mxu0 0
    %1829 = vmatpush1.bf16.msra.mxu0 0
    %1830 = vmatprep.subr.bf16.mxu0 0
    %1831 = vmatpush1.bf16.msra.mxu0 0
    %1832 = vmatprep.subr.bf16.mxu0 0
    %1833 = vmatpush1.bf16.msra.mxu0 0
    %1834 = vmatprep.subr.bf16.mxu0 0
    %1835 = vmatpush1.bf16.msra.mxu0 0
    %1836 = vmatprep.mubr.bf16.mxu0 0
    %1837 = vmatmul.mubr.bf16.gmra.mrb[0].mxu0 %v1781
    %v1838 = vpop.f32.mrb[0].mxu0
    %v1839 = vadd.f32 %v1712, %v1838
    %v1840 = vpop.f32.mrb[0].mxu0
    %v1841 = vpop.f32.mrb[0].mxu0
    %v1842 = vadd.f32 %v1715, %v1841
    %v1843 = vpop.f32.mrb[0].mxu0
    %1844 = vmatprep.mubr.bf16.mxu0 0
    %1845 = vmatmul.mubr.bf16.gmra.mrb[0].mxu0 %v1784
    %v1846 = vpop.f32.mrb[0].mxu0
    %v1847 = vadd.f32 %v1720, %v1846
    %v1848 = vpop.f32.mrb[0].mxu0
    %v1849 = vpop.f32.mrb[0].mxu0
    %v1850 = vadd.f32 %v1723, %v1849
    %v1851 = vpop.f32.mrb[0].mxu0
    %1852 = vmatprep.mubr.bf16.mxu0 0
    %1853 = vmatmul.mubr.bf16.gmra.mrb[0].mxu0 %v1787
    %v1854 = vpop.f32.mrb[0].mxu0
    %v1855 = vadd.f32 %v1728, %v1854
    %v1856 = vpop.f32.mrb[0].mxu0
    %v1857 = vpop.f32.mrb[0].mxu0
    %v1858 = vadd.f32 %v1731, %v1857
    %v1859 = vpop.f32.mrb[0].mxu0
    %1860 = vmatprep.mubr.bf16.mxu0 0
    %1861 = vmatmul.mubr.bf16.gmra.mrb[0].mxu0 %v1790
    %v1862 = vpop.f32.mrb[0].mxu0
    %v1863 = vadd.f32 %v1736, %v1862
    %v1864 = vpop.f32.mrb[0].mxu0
    %v1865 = vpop.f32.mrb[0].mxu0
    %v1866 = vadd.f32 %v1739, %v1865
    %v1867 = vpop.f32.mrb[0].mxu0
    %1868 = vmatprep.mubr.bf16.mxu0 0
    %1869 = vmatmul.mubr.bf16.gmra.mrb[0].mxu0 %v1793
    %v1870 = vpop.f32.mrb[0].mxu0
    %v1871 = vadd.f32 %v1744, %v1870
    %v1872 = vpop.f32.mrb[0].mxu0
    %v1873 = vpop.f32.mrb[0].mxu0
    %v1874 = vadd.f32 %v1747, %v1873
    %v1875 = vpop.f32.mrb[0].mxu0
    %1876 = vmatprep.mubr.bf16.mxu0 0
    %1877 = vmatmul.mubr.bf16.gmra.mrb[0].mxu0 %v1796
    %v1878 = vpop.f32.mrb[0].mxu0
    %v1879 = vadd.f32 %v1752, %v1878
    %v1880 = vpop.f32.mrb[0].mxu0
    %v1881 = vpop.f32.mrb[0].mxu0
    %v1882 = vadd.f32 %v1755, %v1881
    %v1883 = vpop.f32.mrb[0].mxu0
    %1884 = vmatprep.mubr.bf16.mxu0 0
    %1885 = vmatmul.mubr.bf16.gmra.mrb[0].mxu0 %v1799
    %v1886 = vpop.f32.mrb[0].mxu0
    %v1887 = vadd.f32 %v1760, %v1886
    %v1888 = vpop.f32.mrb[0].mxu0
    %v1889 = vpop.f32.mrb[0].mxu0
    %v1890 = vadd.f32 %v1763, %v1889
    %v1891 = vpop.f32.mrb[0].mxu0
    %1892 = vmatprep.mubr.bf16.mxu0 0
    %1893 = vmatmul.mubr.bf16.gmra.mrb[0].mxu0 %v1802
    %v1894 = vpop.f32.mrb[0].mxu0
    %v1895 = vadd.f32 %v1768, %v1894
    %v1896 = vpop.f32.mrb[0].mxu0
    %v1897 = vpop.f32.mrb[0].mxu0
    %v1898 = vadd.f32 %v1771, %v1897
    %v1899 = vpop.f32.mrb[0].mxu0
    %1900 = vdwg.mxu0
    %v1901 = vld [vmem:[%s7] sm:$0x1]
    %v1903 = vlaneseq
    %v1904 = vshrl.u32 %v1903, 7
    %v1905 = vsub.s32 0, %v1904
    %v1906 = vrot.slane %v1901, %v1905
    %v1908 = vadd.f32 %v1839, %v1906
    %v1909 = vadd.f32 %v1842, %v1906
    %v1910 = vadd.f32 %v1847, %v1906
    %v1911 = vadd.f32 %v1850, %v1906
    %v1912 = vadd.f32 %v1855, %v1906
    %v1913 = vadd.f32 %v1858, %v1906
    %v1914 = vadd.f32 %v1863, %v1906
    %v1915 = vadd.f32 %v1866, %v1906
    %v1916 = vadd.f32 %v1871, %v1906
    %v1917 = vadd.f32 %v1874, %v1906
    %v1918 = vadd.f32 %v1879, %v1906
    %v1919 = vadd.f32 %v1882, %v1906
    %v1920 = vadd.f32 %v1887, %v1906
    %v1921 = vadd.f32 %v1890, %v1906
    %v1922 = vadd.f32 %v1895, %v1906
    %v1923 = vadd.f32 %v1898, %v1906
    %v1924 = vadd.f32 %v1908, %v1909
    %v1925 = vadd.f32 %v1924, %v1910
    %v1926 = vadd.f32 %v1925, %v1911
    %v1927 = vadd.f32 %v1926, %v1912
    %v1928 = vadd.f32 %v1927, %v1913
    %v1929 = vadd.f32 %v1928, %v1914
    %v1930 = vadd.f32 %v1929, %v1915
    %v1931 = vrot.slane %v1930, 4
    %v1932 = vadd.f32 %v1930, %v1931
    %v1933 = vrot.slane %v1932, 2
    %v1934 = vadd.f32 %v1932, %v1933
    %v1935 = vrot.slane %v1934, 1
    %v1936 = vadd.f32 %v1934, %v1935
    %v1937 = vadd.f32 %v1916, %v1917
    %v1938 = vadd.f32 %v1937, %v1918
    %v1939 = vadd.f32 %v1938, %v1919
    %v1940 = vadd.f32 %v1939, %v1920
    %v1941 = vadd.f32 %v1940, %v1921
    %v1942 = vadd.f32 %v1941, %v1922
    %v1943 = vadd.f32 %v1942, %v1923
    %v1944 = vrot.slane %v1943, 4
    %v1945 = vadd.f32 %v1943, %v1944
    %v1946 = vrot.slane %v1945, 2
    %v1947 = vadd.f32 %v1945, %v1946
    %v1948 = vrot.slane %v1947, 1
    %v1949 = vadd.f32 %v1947, %v1948
    %v1950 = vmul.f32 %v1936, %v403
    %v1951 = vmul.f32 %v1949, %v403
    %v1952 = vsub.f32 %v1908, %v1950
    %v1953 = vsub.f32 %v1909, %v1950
    %v1954 = vsub.f32 %v1910, %v1950
    %v1955 = vsub.f32 %v1911, %v1950
    %v1956 = vsub.f32 %v1912, %v1950
    %v1957 = vsub.f32 %v1913, %v1950
    %v1958 = vsub.f32 %v1914, %v1950
    %v1959 = vsub.f32 %v1915, %v1950
    %v1960 = vsub.f32 %v1916, %v1951
    %v1961 = vsub.f32 %v1917, %v1951
    %v1962 = vsub.f32 %v1918, %v1951
    %v1963 = vsub.f32 %v1919, %v1951
    %v1964 = vsub.f32 %v1920, %v1951
    %v1965 = vsub.f32 %v1921, %v1951
    %v1966 = vsub.f32 %v1922, %v1951
    %v1967 = vsub.f32 %v1923, %v1951
    %v1968 = vmul.f32 %v1952, %v1952
    %v1969 = vmul.f32 %v1953, %v1953
    %v1970 = vmul.f32 %v1954, %v1954
    %v1971 = vmul.f32 %v1955, %v1955
    %v1972 = vmul.f32 %v1956, %v1956
    %v1973 = vmul.f32 %v1957, %v1957
    %v1974 = vmul.f32 %v1958, %v1958
    %v1975 = vmul.f32 %v1959, %v1959
    %v1976 = vmul.f32 %v1960, %v1960
    %v1977 = vmul.f32 %v1961, %v1961
    %v1978 = vmul.f32 %v1962, %v1962
    %v1979 = vmul.f32 %v1963, %v1963
    %v1980 = vmul.f32 %v1964, %v1964
    %v1981 = vmul.f32 %v1965, %v1965
    %v1982 = vmul.f32 %v1966, %v1966
    %v1983 = vmul.f32 %v1967, %v1967
    %v1984 = vadd.f32 %v1968, %v1969
    %v1985 = vadd.f32 %v1984, %v1970
    %v1986 = vadd.f32 %v1985, %v1971
    %v1987 = vadd.f32 %v1986, %v1972
    %v1988 = vadd.f32 %v1987, %v1973
    %v1989 = vadd.f32 %v1988, %v1974
    %v1990 = vadd.f32 %v1989, %v1975
    %v1991 = vrot.slane %v1990, 4
    %v1992 = vadd.f32 %v1990, %v1991
    %v1993 = vrot.slane %v1992, 2
    %v1994 = vadd.f32 %v1992, %v1993
    %v1995 = vrot.slane %v1994, 1
    %v1996 = vadd.f32 %v1994, %v1995
    %v1997 = vadd.f32 %v1976, %v1977
    %v1998 = vadd.f32 %v1997, %v1978
    %v1999 = vadd.f32 %v1998, %v1979
    %v2000 = vadd.f32 %v1999, %v1980
    %v2001 = vadd.f32 %v2000, %v1981
    %v2002 = vadd.f32 %v2001, %v1982
    %v2003 = vadd.f32 %v2002, %v1983
    %v2004 = vrot.slane %v2003, 4
    %v2005 = vadd.f32 %v2003, %v2004
    %v2006 = vrot.slane %v2005, 2
    %v2007 = vadd.f32 %v2005, %v2006
    %v2008 = vrot.slane %v2007, 1
    %v2009 = vadd.f32 %v2007, %v2008
    %v2010 = vmul.f32 %v1996, %v403
    %v2011 = vmul.f32 %v2009, %v403
    %v2012 = vadd.f32 %v2010, 1e-05
    %v2013 = vadd.f32 %v2011, 1e-05
    %v2014 = vrsqrt.pop %v2012
    %v2015 = vrsqrt.pop %v2013
    %v2016 = vmul.f32 %v1952, %v2014
    %v2017 = vmul.f32 %v1953, %v2014
    %v2018 = vmul.f32 %v1954, %v2014
    %v2019 = vmul.f32 %v1955, %v2014
    %v2020 = vmul.f32 %v1956, %v2014
    %v2021 = vmul.f32 %v1957, %v2014
    %v2022 = vmul.f32 %v1958, %v2014
    %v2023 = vmul.f32 %v1959, %v2014
    %v2024 = vmul.f32 %v1960, %v2015
    %v2025 = vmul.f32 %v1961, %v2015
    %v2026 = vmul.f32 %v1962, %v2015
    %v2027 = vmul.f32 %v1963, %v2015
    %v2028 = vmul.f32 %v1964, %v2015
    %v2029 = vmul.f32 %v1965, %v2015
    %v2030 = vmul.f32 %v1966, %v2015
    %v2031 = vmul.f32 %v1967, %v2015
    %v2032 = vmul.f32 %v345, %v2016
    %v2033 = vmul.f32 %v346, %v2017
    %v2034 = vmul.f32 %v347, %v2018
    %v2035 = vmul.f32 %v348, %v2019
    %v2036 = vmul.f32 %v349, %v2020
    %v2037 = vmul.f32 %v350, %v2021
    %v2038 = vmul.f32 %v351, %v2022
    %v2039 = vmul.f32 %v352, %v2023
    %v2040 = vmul.f32 %v353, %v2024
    %v2041 = vmul.f32 %v354, %v2025
    %v2042 = vmul.f32 %v355, %v2026
    %v2043 = vmul.f32 %v356, %v2027
    %v2044 = vmul.f32 %v357, %v2028
    %v2045 = vmul.f32 %v358, %v2029
    %v2046 = vmul.f32 %v359, %v2030
    %v2047 = vmul.f32 %v360, %v2031
    %v2048 = vpack.c.bf16 %v2033, %v2032
    %v2049 = vpack.c.bf16 %v2035, %v2034
    %v2050 = vpack.c.bf16 %v2037, %v2036
    %v2051 = vpack.c.bf16 %v2039, %v2038
    %v2052 = vpack.c.bf16 %v2041, %v2040
    %v2053 = vpack.c.bf16 %v2043, %v2042
    %v2054 = vpack.c.bf16 %v2045, %v2044
    %v2055 = vpack.c.bf16 %v2047, %v2046
    %v2056 = vld [vmem:[%s8] sm:$0xf]
    %v2057 = vld [vmem:[%s8 + $0x4] sm:$0xf]
    %v2058 = vld [vmem:[%s8 + $0x8] sm:$0xf]
    %v2059 = vld [vmem:[%s8 + $0xc] sm:$0xf]
    %v2060 = vld [vmem:[%s8 + $0x10] sm:$0xf]
    %v2061 = vld [vmem:[%s8 + $0x14] sm:$0xf]
    %v2062 = vld [vmem:[%s8 + $0x18] sm:$0xf]
    %v2063 = vld [vmem:[%s8 + $0x1c] sm:$0xf]
    %v2064 = vld [vmem:[%s8 + $0x20] sm:$0xf]
    %v2065 = vld [vmem:[%s8 + $0x24] sm:$0xf]
    %v2066 = vld [vmem:[%s8 + $0x28] sm:$0xf]
    %v2067 = vld [vmem:[%s8 + $0x2c] sm:$0xf]
    %v2068 = vld [vmem:[%s8 + $0x30] sm:$0xf]
    %v2069 = vld [vmem:[%s8 + $0x34] sm:$0xf]
    %v2070 = vld [vmem:[%s8 + $0x38] sm:$0xf]
    %v2071 = vld [vmem:[%s8 + $0x3c] sm:$0xf]
    %v2072 = vld [vmem:[%s9] sm:$0x1]
    %v2074 = vlaneseq
    %v2075 = vshrl.u32 %v2074, 7
    %v2076 = vsub.s32 0, %v2075
    %v2077 = vrot.slane %v2072, %v2076
    %v2095 = vunpack.c.l.b16 %v2056
    %v2096 = vunpack.c.l.b16 %v2057
    %v2097 = vunpack.c.l.b16 %v2058
    %v2098 = vunpack.c.l.b16 %v2059
    %v2099 = vunpack.c.l.b16 %v2060
    %v2100 = vunpack.c.l.b16 %v2061
    %v2101 = vunpack.c.l.b16 %v2062
    %v2102 = vunpack.c.l.b16 %v2063
    %v2103 = vunpack.c.l.b16 %v2064
    %v2104 = vunpack.c.l.b16 %v2065
    %v2105 = vunpack.c.l.b16 %v2066
    %v2106 = vunpack.c.l.b16 %v2067
    %v2107 = vunpack.c.l.b16 %v2068
    %v2108 = vunpack.c.l.b16 %v2069
    %v2109 = vunpack.c.l.b16 %v2070
    %v2110 = vunpack.c.l.b16 %v2071
    %v2111 = vpack.c.b16 %v2096, %v2095
    %v2112 = vpack.c.b16 %v2098, %v2097
    %v2113 = vpack.c.b16 %v2100, %v2099
    %v2114 = vpack.c.b16 %v2102, %v2101
    %v2115 = vpack.c.b16 %v2104, %v2103
    %v2116 = vpack.c.b16 %v2106, %v2105
    %v2117 = vpack.c.b16 %v2108, %v2107
    %v2118 = vpack.c.b16 %v2110, %v2109
    %2127 = vmatprep.subr.bf16.mxu0 0
    %2128 = vmatpush1.bf16.msra.mxu0 %v2111
    %2129 = vmatprep.subr.bf16.mxu0 0
    %2130 = vmatpush1.bf16.msra.mxu0 %v2112
    %2131 = vmatprep.subr.bf16.mxu0 0
    %2132 = vmatpush1.bf16.msra.mxu0 %v2113
    %2133 = vmatprep.subr.bf16.mxu0 0
    %2134 = vmatpush1.bf16.msra.mxu0 %v2114
    %2135 = vmatprep.subr.bf16.mxu0 0
    %2136 = vmatpush1.bf16.msra.mxu0 %v2115
    %2137 = vmatprep.subr.bf16.mxu0 0
    %2138 = vmatpush1.bf16.msra.mxu0 %v2116
    %2139 = vmatprep.subr.bf16.mxu0 0
    %2140 = vmatpush1.bf16.msra.mxu0 %v2117
    %2141 = vmatprep.subr.bf16.mxu0 0
    %2142 = vmatpush1.bf16.msra.mxu0 %v2118
    %2143 = vmatprep.subr.bf16.mxu0 0
    %2144 = vmatpush1.bf16.msra.mxu0 0
    %2145 = vmatprep.subr.bf16.mxu0 0
    %2146 = vmatpush1.bf16.msra.mxu0 0
    %2147 = vmatprep.subr.bf16.mxu0 0
    %2148 = vmatpush1.bf16.msra.mxu0 0
    %2149 = vmatprep.subr.bf16.mxu0 0
    %2150 = vmatpush1.bf16.msra.mxu0 0
    %2151 = vmatprep.subr.bf16.mxu0 0
    %2152 = vmatpush1.bf16.msra.mxu0 0
    %2153 = vmatprep.subr.bf16.mxu0 0
    %2154 = vmatpush1.bf16.msra.mxu0 0
    %2155 = vmatprep.subr.bf16.mxu0 0
    %2156 = vmatpush1.bf16.msra.mxu0 0
    %2157 = vmatprep.subr.bf16.mxu0 0
    %2158 = vmatpush1.bf16.msra.mxu0 0
    %2159 = vmatprep.mubr.bf16.mxu0 0
    %2160 = vmatmul.mubr.bf16.gmra.mrb[0].mxu0 %v2048
    %v2161 = vpop.f32.mrb[0].mxu0
    %v2162 = vadd.f32 %v2077, %v2161
    %v2163 = vpop.f32.mrb[0].mxu0
    %v2164 = vpop.f32.mrb[0].mxu0
    %v2165 = vadd.f32 %v2077, %v2164
    %v2166 = vpop.f32.mrb[0].mxu0
    %2167 = vmatprep.mubr.bf16.mxu0 0
    %2168 = vmatmul.mubr.bf16.gmra.mrb[0].mxu0 %v2049
    %v2169 = vpop.f32.mrb[0].mxu0
    %v2170 = vadd.f32 %v2077, %v2169
    %v2171 = vpop.f32.mrb[0].mxu0
    %v2172 = vpop.f32.mrb[0].mxu0
    %v2173 = vadd.f32 %v2077, %v2172
    %v2174 = vpop.f32.mrb[0].mxu0
    %2175 = vmatprep.mubr.bf16.mxu0 0
    %2176 = vmatmul.mubr.bf16.gmra.mrb[0].mxu0 %v2050
    %v2177 = vpop.f32.mrb[0].mxu0
    %v2178 = vadd.f32 %v2077, %v2177
    %v2179 = vpop.f32.mrb[0].mxu0
    %v2180 = vpop.f32.mrb[0].mxu0
    %v2181 = vadd.f32 %v2077, %v2180
    %v2182 = vpop.f32.mrb[0].mxu0
    %2183 = vmatprep.mubr.bf16.mxu0 0
    %2184 = vmatmul.mubr.bf16.gmra.mrb[0].mxu0 %v2051
    %v2185 = vpop.f32.mrb[0].mxu0
    %v2186 = vadd.f32 %v2077, %v2185
    %v2187 = vpop.f32.mrb[0].mxu0
    %v2188 = vpop.f32.mrb[0].mxu0
    %v2189 = vadd.f32 %v2077, %v2188
    %v2190 = vpop.f32.mrb[0].mxu0
    %2191 = vmatprep.mubr.bf16.mxu0 0
    %2192 = vmatmul.mubr.bf16.gmra.mrb[0].mxu0 %v2052
    %v2193 = vpop.f32.mrb[0].mxu0
    %v2194 = vadd.f32 %v2077, %v2193
    %v2195 = vpop.f32.mrb[0].mxu0
    %v2196 = vpop.f32.mrb[0].mxu0
    %v2197 = vadd.f32 %v2077, %v2196
    %v2198 = vpop.f32.mrb[0].mxu0
    %2199 = vmatprep.mubr.bf16.mxu0 0
    %2200 = vmatmul.mubr.bf16.gmra.mrb[0].mxu0 %v2053
    %v2201 = vpop.f32.mrb[0].mxu0
    %v2202 = vadd.f32 %v2077, %v2201
    %v2203 = vpop.f32.mrb[0].mxu0
    %v2204 = vpop.f32.mrb[0].mxu0
    %v2205 = vadd.f32 %v2077, %v2204
    %v2206 = vpop.f32.mrb[0].mxu0
    %2207 = vmatprep.mubr.bf16.mxu0 0
    %2208 = vmatmul.mubr.bf16.gmra.mrb[0].mxu0 %v2054
    %v2209 = vpop.f32.mrb[0].mxu0
    %v2210 = vadd.f32 %v2077, %v2209
    %v2211 = vpop.f32.mrb[0].mxu0
    %v2212 = vpop.f32.mrb[0].mxu0
    %v2213 = vadd.f32 %v2077, %v2212
    %v2214 = vpop.f32.mrb[0].mxu0
    %2215 = vmatprep.mubr.bf16.mxu0 0
    %2216 = vmatmul.mubr.bf16.gmra.mrb[0].mxu0 %v2055
    %v2217 = vpop.f32.mrb[0].mxu0
    %v2218 = vadd.f32 %v2077, %v2217
    %v2219 = vpop.f32.mrb[0].mxu0
    %v2220 = vpop.f32.mrb[0].mxu0
    %v2221 = vadd.f32 %v2077, %v2220
    %v2222 = vpop.f32.mrb[0].mxu0
    %2223 = vdwg.mxu0
    %v2224 = vmul.f32 %v2162, 0.5
    %v2225 = vmul.f32 %v2165, 0.5
    %v2226 = vmul.f32 %v2170, 0.5
    %v2227 = vmul.f32 %v2173, 0.5
    %v2228 = vmul.f32 %v2178, 0.5
    %v2229 = vmul.f32 %v2181, 0.5
    %v2230 = vmul.f32 %v2186, 0.5
    %v2231 = vmul.f32 %v2189, 0.5
    %v2232 = vmul.f32 %v2194, 0.5
    %v2233 = vmul.f32 %v2197, 0.5
    %v2234 = vmul.f32 %v2202, 0.5
    %v2235 = vmul.f32 %v2205, 0.5
    %v2236 = vmul.f32 %v2210, 0.5
    %v2237 = vmul.f32 %v2213, 0.5
    %v2238 = vmul.f32 %v2218, 0.5
    %v2239 = vmul.f32 %v2221, 0.5
    %v2240 = vmul.f32 %v2162, 0.70710677
    %v2241 = vmul.f32 %v2165, 0.70710677
    %v2242 = vmul.f32 %v2170, 0.70710677
    %v2243 = vmul.f32 %v2173, 0.70710677
    %v2244 = vmul.f32 %v2178, 0.70710677
    %v2245 = vmul.f32 %v2181, 0.70710677
    %v2246 = vmul.f32 %v2186, 0.70710677
    %v2247 = vmul.f32 %v2189, 0.70710677
    %v2248 = vmul.f32 %v2194, 0.70710677
    %v2249 = vmul.f32 %v2197, 0.70710677
    %v2250 = vmul.f32 %v2202, 0.70710677
    %v2251 = vmul.f32 %v2205, 0.70710677
    %v2252 = vmul.f32 %v2210, 0.70710677
    %v2253 = vmul.f32 %v2213, 0.70710677
    %v2254 = vmul.f32 %v2218, 0.70710677
    %v2255 = vmul.f32 %v2221, 0.70710677
    %v2256 = verf.f32.pop %v2240
    %v2257 = verf.f32.pop %v2241
    %v2258 = verf.f32.pop %v2242
    %v2259 = verf.f32.pop %v2243
    %v2260 = verf.f32.pop %v2244
    %v2261 = verf.f32.pop %v2245
    %v2262 = verf.f32.pop %v2246
    %v2263 = verf.f32.pop %v2247
    %v2264 = verf.f32.pop %v2248
    %v2265 = verf.f32.pop %v2249
    %v2266 = verf.f32.pop %v2250
    %v2267 = verf.f32.pop %v2251
    %v2268 = verf.f32.pop %v2252
    %v2269 = verf.f32.pop %v2253
    %v2270 = verf.f32.pop %v2254
    %v2271 = verf.f32.pop %v2255
    %v2272 = vadd.f32 %v2256, 1.0
    %v2273 = vadd.f32 %v2257, 1.0
    %v2274 = vadd.f32 %v2258, 1.0
    %v2275 = vadd.f32 %v2259, 1.0
    %v2276 = vadd.f32 %v2260, 1.0
    %v2277 = vadd.f32 %v2261, 1.0
    %v2278 = vadd.f32 %v2262, 1.0
    %v2279 = vadd.f32 %v2263, 1.0
    %v2280 = vadd.f32 %v2264, 1.0
    %v2281 = vadd.f32 %v2265, 1.0
    %v2282 = vadd.f32 %v2266, 1.0
    %v2283 = vadd.f32 %v2267, 1.0
    %v2284 = vadd.f32 %v2268, 1.0
    %v2285 = vadd.f32 %v2269, 1.0
    %v2286 = vadd.f32 %v2270, 1.0
    %v2287 = vadd.f32 %v2271, 1.0
    %v2288 = vmul.f32 %v2224, %v2272
    %v2289 = vmul.f32 %v2225, %v2273
    %v2290 = vmul.f32 %v2226, %v2274
    %v2291 = vmul.f32 %v2227, %v2275
    %v2292 = vmul.f32 %v2228, %v2276
    %v2293 = vmul.f32 %v2229, %v2277
    %v2294 = vmul.f32 %v2230, %v2278
    %v2295 = vmul.f32 %v2231, %v2279
    %v2296 = vmul.f32 %v2232, %v2280
    %v2297 = vmul.f32 %v2233, %v2281
    %v2298 = vmul.f32 %v2234, %v2282
    %v2299 = vmul.f32 %v2235, %v2283
    %v2300 = vmul.f32 %v2236, %v2284
    %v2301 = vmul.f32 %v2237, %v2285
    %v2302 = vmul.f32 %v2238, %v2286
    %v2303 = vmul.f32 %v2239, %v2287
    %2304 = vst [vmem:[#allocation5] sm:$0xff] %v2288
    %2305 = vst [vmem:[#allocation5 + $0x8] sm:$0xff] %v2289
    %2306 = vst [vmem:[#allocation5 + $0x10] sm:$0xff] %v2290
    %2307 = vst [vmem:[#allocation5 + $0x18] sm:$0xff] %v2291
    %2308 = vst [vmem:[#allocation5 + $0x20] sm:$0xff] %v2292
    %2309 = vst [vmem:[#allocation5 + $0x28] sm:$0xff] %v2293
    %2310 = vst [vmem:[#allocation5 + $0x30] sm:$0xff] %v2294
    %2311 = vst [vmem:[#allocation5 + $0x38] sm:$0xff] %v2295
    %2312 = vst [vmem:[#allocation5 + $0x40] sm:$0xff] %v2296
    %2313 = vst [vmem:[#allocation5 + $0x48] sm:$0xff] %v2297
    %2314 = vst [vmem:[#allocation5 + $0x50] sm:$0xff] %v2298
    %2315 = vst [vmem:[#allocation5 + $0x58] sm:$0xff] %v2299
    %2316 = vst [vmem:[#allocation5 + $0x60] sm:$0xff] %v2300
    %2317 = vst [vmem:[#allocation5 + $0x68] sm:$0xff] %v2301
    %2318 = vst [vmem:[#allocation5 + $0x70] sm:$0xff] %v2302
    %2319 = vst [vmem:[#allocation5 + $0x78] sm:$0xff] %v2303
    // Predicated region
    $region46: #{tpu_custom_call.1} parent=1 // pred_check
      _
    $region47: #{tpu_custom_call.1} parent=1 // pred_check_branch
      %2321 = sbr.rel (0) target = $region49
    $region48: #{tpu_custom_call.1} parent=1 // pred_region
      %s2323 = ssub.s32 2048, 2048
      %2324 = vsyncadd [#allocation4], %s2323
      %s2325 = sshll.u32 [#allocation5], 4
      %s2326 = int_to_ptr.vmem [resolvable:$true] %s2325
      %2331 = dma.vmem_to_hbm [thread:$0]  %s2326, 2048, %s10, [#allocation4], 128, 128, 8
    $region49: #{tpu_custom_call.1} parent=1 // pred_fallthru
      _
    // Predicated region
    $region50: #{tpu_custom_call.1} parent=1 // pred_check
      _
    $region51: #{tpu_custom_call.1} parent=1 // pred_check_branch
      %2333 = sbr.rel (0) target = $region53
    $region52: #{tpu_custom_call.1} parent=1 // pred_region
      %2334 = dma.done [#allocation4], 2048
    $region53: #{tpu_custom_call.1} parent=1 // pred_fallthru
      _
    %2335 = vsyncpa [#allocation3], 1
    %2336 = vsyncpa [#allocation4], 1

</llo_original>
